<compile_context>
chip_gen: v6e
topology: v6e:2x2x1
jax: 0.10.0
libtpu: 0.0.40
codegen_flags: <defaults>
</compile_context>

<pallas_src>
import jax
import jax.numpy as jnp
from jax.experimental import pallas as pl
from jax.experimental.pallas import tpu as pltpu

BN_EPS = 1e-5
LANE = 128


def _round_up(x, m):
    return (x + m - 1) // m * m


def _conv_stats_call(halo, w9, *, tile_h, wp, wu, cp):
    """Pass 1: 3x3 conv (9 shifted matmuls per halo tile) + BN partial sums."""
    t, halo_rows, cin = halo.shape
    tile_hw = tile_h * wp  # rows produced per tile (incl. wp-wu over-computed cols/row)

    def kernel(x_ref, w_ref, y_ref, stats_ref):
        acc = jnp.zeros((tile_hw, cp), jnp.float32)
        for idx in range(9):                       # static unroll over the 3x3 taps
            ki, kj = idx // 3, idx % 3
            start = ki * wp + kj                   # flat shift within the halo slab
            lhs = x_ref[0, start:start + tile_hw, :]            # (tile_hw, cin)
            acc = acc + jnp.dot(lhs, w_ref[idx],
                                preferred_element_type=jnp.float32)
        y_ref[0] = acc
        # BN partial sums over valid output columns only (last wp-wu columns of each
        # padded row are halo over-compute and are discarded by the wrapper).
        col = jax.lax.broadcasted_iota(jnp.int32, (tile_hw, 1), 0) % wp
        valid = (col < wu).astype(jnp.float32)
        stats_ref[0, 0:1, :] = jnp.sum(acc * valid, axis=0, keepdims=True)
        stats_ref[0, 1:2, :] = jnp.sum(acc * acc * valid, axis=0, keepdims=True)

    return pl.pallas_call(
        kernel,
        out_shape=(jax.ShapeDtypeStruct((t, tile_hw, cp), jnp.float32),
                   jax.ShapeDtypeStruct((t, 2, cp), jnp.float32)),
        grid=(t,),
        in_specs=[
            pl.BlockSpec((1, halo_rows, cin), lambda i: (i, 0, 0)),   # halo tile
            pl.BlockSpec((9, cin, cp), lambda i: (0, 0, 0)),          # resident weights
        ],
        out_specs=(
            pl.BlockSpec((1, tile_hw, cp), lambda i: (i, 0, 0)),      # conv output
            pl.BlockSpec((1, 2, cp), lambda i: (i, 0, 0)),            # per-tile stats
        ),
        compiler_params=pltpu.CompilerParams(
            dimension_semantics=("parallel",)),
    )(halo, w9)


def _bn_relu_call(y_ext, scale_shift):
    """Pass 2: out = max(y * scale + shift, 0), lane-dense, aliasing the conv buffer."""
    t, tile_hw, cp = y_ext.shape

    def kernel(y_ref, ss_ref, o_ref):
        y = y_ref[0]                                 # (tile_hw, cp)
        scale = ss_ref[0:1, :]                       # (1, cp), resident
        shift = ss_ref[1:2, :]
        o_ref[0] = jnp.maximum(y * scale + shift, 0.0).astype(o_ref.dtype)

    return pl.pallas_call(
        kernel,
        out_shape=jax.ShapeDtypeStruct((t, tile_hw, cp), jnp.float32),
        grid=(t,),
        in_specs=[
            pl.BlockSpec((1, tile_hw, cp), lambda i: (i, 0, 0)),
            pl.BlockSpec((2, cp), lambda i: (0, 0)),                  # resident scale/shift
        ],
        out_specs=pl.BlockSpec((1, tile_hw, cp), lambda i: (i, 0, 0)),
        input_output_aliases={0: 0},                                  # reuse conv output buffer
        compiler_params=pltpu.CompilerParams(
            dimension_semantics=("parallel",)),
    )(y_ext, scale_shift)


def upconvblock_forward(x, weight, bias, gamma, beta, pad_like_shape, *, tile_h=8):
    """Upconvblock.forward(x, pad_like) with deconv=False (upsample path)."""
    del bias  # exactly cancelled by training-mode BatchNorm mean subtraction
    n, cin, h, w = x.shape
    cout = weight.shape[0]

    # --- Upsample(scale_factor=2, mode='nearest') ---
    xu = jnp.repeat(jnp.repeat(x, 2, axis=2), 2, axis=3)      # (n, cin, hu, wu)
    hu, wu = 2 * h, 2 * w

    # --- layout prep: NHWC, spatial zero-pad, overlapping row-halo tiles ---
    # tile_h ~ a few rows is plenty for the toy size; for real sizes pick the largest
    # tile_h that keeps 2*(tile_h+2)*wp*cin + 2*tile_h*wp*cp f32 words well under the
    # scoped VMEM limit (budget for v7x's 64 MiB, not v5e/v6e's 128 MiB).
    while hu % tile_h:
        tile_h -= 1
    hb = hu // tile_h
    wp = wu + 2
    x_nhwc = jnp.transpose(xu, (0, 2, 3, 1))
    xp = jnp.pad(x_nhwc, ((0, 0), (1, 1), (1, 1), (0, 0)))    # (n, hu+2, wp, cin)
    halo = jnp.stack(
        [xp[:, b * tile_h: b * tile_h + tile_h + 2] for b in range(hb)], axis=1)
    halo = halo.reshape(n * hb, (tile_h + 2) * wp, cin)
    halo = jnp.pad(halo, ((0, 0), (0, 2), (0, 0)))            # slack for flat-shift over-read

    # Weights: (cout, cin, 3, 3) -> (9, cin, cp), cout lane-padded to a multiple of 128.
    cp = _round_up(cout, LANE)
    w9 = jnp.transpose(weight, (2, 3, 1, 0)).reshape(9, cin, cout)
    w9 = jnp.pad(w9, ((0, 0), (0, 0), (0, cp - cout))).astype(jnp.float32)

    # --- pass 1: conv + per-tile BN partial sums ---
    y_ext, stats = _conv_stats_call(halo.astype(jnp.float32), w9,
                                    tile_h=tile_h, wp=wp, wu=wu, cp=cp)

    # --- fold BN (training-mode batch stats) into one per-channel FMA ---
    count = float(n * hu * wu)
    ssum = jnp.sum(stats[:, 0, :], axis=0)                    # (cp,)
    ssq = jnp.sum(stats[:, 1, :], axis=0)
    mean = ssum / count
    var = jnp.maximum(ssq / count - mean * mean, 0.0)         # biased var (PyTorch BN)
    gamma_p = jnp.pad(gamma.astype(jnp.float32), (0, cp - cout))
    beta_p = jnp.pad(beta.astype(jnp.float32), (0, cp - cout))
    scale = gamma_p * jax.lax.rsqrt(var + BN_EPS)
    shift = beta_p - mean * scale
    scale_shift = jnp.stack([scale, shift], axis=0)           # (2, cp)

    # --- pass 2: normalize + ReLU ---
    out_ext = _bn_relu_call(y_ext, scale_shift)

    # --- drop halo over-compute cols + channel padding, back to NCHW ---
    out = out_ext.reshape(n, hb, tile_h, wp, cp)[:, :, :, :wu, :cout]
    out = out.reshape(n, hu, wu, cout).transpose(0, 3, 1, 2)

    # --- F.pad(x1, [dx//2, dx-dx//2, dy//2, dy-dy//2]) to match pad_like ---
    dy = pad_like_shape[2] - hu
    dx = pad_like_shape[3] - wu
    return jnp.pad(out, ((0, 0), (0, 0),
                         (dy // 2, dy - dy // 2), (dx // 2, dx - dx // 2)))


def _reference(x, weight, bias, gamma, beta, pad_like_shape):
    """Pure-JAX reference matching PyTorch Upconvblock.forward (deconv=False, training BN)."""
    xu = jnp.repeat(jnp.repeat(x, 2, axis=2), 2, axis=3)
    y = jax.lax.conv_general_dilated(
        xu, weight, window_strides=(1, 1), padding=((1, 1), (1, 1)),
        dimension_numbers=("NCHW", "OIHW", "NCHW"))
    y = y + bias.reshape(1, -1, 1, 1)
    mean = jnp.mean(y, axis=(0, 2, 3), keepdims=True)
    var = jnp.mean((y - mean) ** 2, axis=(0, 2, 3), keepdims=True)
    y = (y - mean) * jax.lax.rsqrt(var + BN_EPS)
    y = y * gamma.reshape(1, -1, 1, 1) + beta.reshape(1, -1, 1, 1)
    y = jnp.maximum(y, 0.0)
    dy = pad_like_shape[2] - y.shape[2]
    dx = pad_like_shape[3] - y.shape[3]
    return jnp.pad(y, ((0, 0), (0, 0),
                       (dy // 2, dy - dy // 2), (dx // 2, dx - dx // 2)))


if __name__ == "__main__":
    N, C_IN, C_OUT, H, W = 2, 4, 4, 8, 8          # upsampled spatial = 16x16

    key = jax.random.PRNGKey(0)
    kx, kw_, kb, kg, kbe = jax.random.split(key, 5)

    x = jax.random.normal(kx, (N, C_IN, H, W), dtype=jnp.float32)

    # Parameter init (shapes from nn.Conv2d(C_IN, C_OUT, 3) / nn.BatchNorm2d(C_OUT)).
    fan_in = C_IN * 3 * 3
    bound = 1.0 / (fan_in ** 0.5)
    weight = jax.random.uniform(kw_, (C_OUT, C_IN, 3, 3), jnp.float32, -bound, bound)
    bias = jax.random.uniform(kb, (C_OUT,), jnp.float32, -bound, bound)
    gamma = 1.0 + 0.1 * jax.random.normal(kg, (C_OUT,), jnp.float32)
    beta = 0.1 * jax.random.normal(kbe, (C_OUT,), jnp.float32)

    # Skip-connection tensor shape ("pad_like"): slightly larger spatial than 2x upsample.
    pad_like_shape = (N, C_OUT, 2 * H + 2, 2 * W + 2)

    out = jax.block_until_ready(
        upconvblock_forward(x, weight, bias, gamma, beta, pad_like_shape))

    ref = jax.block_until_ready(
        _reference(x, weight, bias, gamma, beta, pad_like_shape))

    assert out.shape == pad_like_shape, f"bad shape {out.shape}"
    assert jnp.allclose(out, ref, rtol=1e-4, atol=1e-4), "mismatch vs reference"

    print("KERNEL_OK")
</pallas_src>

<mosaic_0001>
module attributes {stable_mosaic.version = 11 : i64} {
  func.func @kernel(%arg0: i32, %arg1: memref<1x182x4xf32, #tpu.memory_space<vmem>>, %arg2: memref<9x4x128xf32, #tpu.memory_space<vmem>>, %arg3: memref<1x144x128xf32, #tpu.memory_space<vmem>>, %arg4: memref<1x2x128xf32, #tpu.memory_space<vmem>>) attributes {dimension_semantics = [#tpu.dimension_semantics<parallel>], iteration_bounds = array<i64: 4>, scalar_prefetch = 0 : i64, scratch_operands = 0 : i64, tpu.core_type = #tpu.core_type<tc>, window_params = [{transform_indices = @transform_0, window_bounds = array<i64: 1, 182, 4>}, {pipeline_mode = #tpu.pipeline_mode<synchronous>, transform_indices = @transform_1, window_bounds = array<i64: 9, 4, 128>}, {transform_indices = @transform_2, window_bounds = array<i64: 1, 144, 128>}, {transform_indices = @transform_3, window_bounds = array<i64: 1, 2, 128>}]} {
    %cst = arith.constant 0.000000e+00 : f32
    %0 = vector.broadcast %cst : f32 to vector<144x128xf32>
    %c0 = arith.constant 0 : index
    %c0_0 = arith.constant 0 : index
    %c0_1 = arith.constant 0 : index
    %1 = vector.load %arg1[%c0, %c0_0, %c0_1] : memref<1x182x4xf32, #tpu.memory_space<vmem>>, vector<1x144x4xf32>
    %2 = vector.shape_cast %1 : vector<1x144x4xf32> to vector<144x4xf32>
    %c0_2 = arith.constant 0 : index
    %c0_3 = arith.constant 0 : index
    %c0_4 = arith.constant 0 : index
    %3 = vector.load %arg2[%c0_2, %c0_3, %c0_4] : memref<9x4x128xf32, #tpu.memory_space<vmem>>, vector<1x4x128xf32>
    %4 = vector.shape_cast %3 : vector<1x4x128xf32> to vector<4x128xf32>
    %cst_5 = arith.constant dense<0.000000e+00> : vector<144x128xf32>
    %5 = tpu.matmul %2, %4, %cst_5 {dimension_numbers = #tpu.dot_dimension_numbers<[1], [0], [0], [1], [0, 0, 1, 1], [], []>} : vector<144x4xf32>, vector<4x128xf32>, vector<144x128xf32> -> vector<144x128xf32>
    %6 = arith.addf %0, %5 : vector<144x128xf32>
    %c0_6 = arith.constant 0 : index
    %c1 = arith.constant 1 : index
    %c0_7 = arith.constant 0 : index
    %7 = vector.load %arg1[%c0_6, %c1, %c0_7] : memref<1x182x4xf32, #tpu.memory_space<vmem>>, vector<1x144x4xf32>
    %8 = vector.shape_cast %7 : vector<1x144x4xf32> to vector<144x4xf32>
    %c1_8 = arith.constant 1 : index
    %c0_9 = arith.constant 0 : index
    %c0_10 = arith.constant 0 : index
    %9 = vector.load %arg2[%c1_8, %c0_9, %c0_10] : memref<9x4x128xf32, #tpu.memory_space<vmem>>, vector<1x4x128xf32>
    %10 = vector.shape_cast %9 : vector<1x4x128xf32> to vector<4x128xf32>
    %cst_11 = arith.constant dense<0.000000e+00> : vector<144x128xf32>
    %11 = tpu.matmul %8, %10, %cst_11 {dimension_numbers = #tpu.dot_dimension_numbers<[1], [0], [0], [1], [0, 0, 1, 1], [], []>} : vector<144x4xf32>, vector<4x128xf32>, vector<144x128xf32> -> vector<144x128xf32>
    %12 = arith.addf %6, %11 : vector<144x128xf32>
    %c0_12 = arith.constant 0 : index
    %c2 = arith.constant 2 : index
    %c0_13 = arith.constant 0 : index
    %13 = vector.load %arg1[%c0_12, %c2, %c0_13] : memref<1x182x4xf32, #tpu.memory_space<vmem>>, vector<1x144x4xf32>
    %14 = vector.shape_cast %13 : vector<1x144x4xf32> to vector<144x4xf32>
    %c2_14 = arith.constant 2 : index
    %c0_15 = arith.constant 0 : index
    %c0_16 = arith.constant 0 : index
    %15 = vector.load %arg2[%c2_14, %c0_15, %c0_16] : memref<9x4x128xf32, #tpu.memory_space<vmem>>, vector<1x4x128xf32>
    %16 = vector.shape_cast %15 : vector<1x4x128xf32> to vector<4x128xf32>
    %cst_17 = arith.constant dense<0.000000e+00> : vector<144x128xf32>
    %17 = tpu.matmul %14, %16, %cst_17 {dimension_numbers = #tpu.dot_dimension_numbers<[1], [0], [0], [1], [0, 0, 1, 1], [], []>} : vector<144x4xf32>, vector<4x128xf32>, vector<144x128xf32> -> vector<144x128xf32>
    %18 = arith.addf %12, %17 : vector<144x128xf32>
    %c0_18 = arith.constant 0 : index
    %c18 = arith.constant 18 : index
    %c0_19 = arith.constant 0 : index
    %19 = vector.load %arg1[%c0_18, %c18, %c0_19] : memref<1x182x4xf32, #tpu.memory_space<vmem>>, vector<1x144x4xf32>
    %20 = vector.shape_cast %19 : vector<1x144x4xf32> to vector<144x4xf32>
    %c3 = arith.constant 3 : index
    %c0_20 = arith.constant 0 : index
    %c0_21 = arith.constant 0 : index
    %21 = vector.load %arg2[%c3, %c0_20, %c0_21] : memref<9x4x128xf32, #tpu.memory_space<vmem>>, vector<1x4x128xf32>
    %22 = vector.shape_cast %21 : vector<1x4x128xf32> to vector<4x128xf32>
    %cst_22 = arith.constant dense<0.000000e+00> : vector<144x128xf32>
    %23 = tpu.matmul %20, %22, %cst_22 {dimension_numbers = #tpu.dot_dimension_numbers<[1], [0], [0], [1], [0, 0, 1, 1], [], []>} : vector<144x4xf32>, vector<4x128xf32>, vector<144x128xf32> -> vector<144x128xf32>
    %24 = arith.addf %18, %23 : vector<144x128xf32>
    %c0_23 = arith.constant 0 : index
    %c19 = arith.constant 19 : index
    %c0_24 = arith.constant 0 : index
    %25 = vector.load %arg1[%c0_23, %c19, %c0_24] : memref<1x182x4xf32, #tpu.memory_space<vmem>>, vector<1x144x4xf32>
    %26 = vector.shape_cast %25 : vector<1x144x4xf32> to vector<144x4xf32>
    %c4 = arith.constant 4 : index
    %c0_25 = arith.constant 0 : index
    %c0_26 = arith.constant 0 : index
    %27 = vector.load %arg2[%c4, %c0_25, %c0_26] : memref<9x4x128xf32, #tpu.memory_space<vmem>>, vector<1x4x128xf32>
    %28 = vector.shape_cast %27 : vector<1x4x128xf32> to vector<4x128xf32>
    %cst_27 = arith.constant dense<0.000000e+00> : vector<144x128xf32>
    %29 = tpu.matmul %26, %28, %cst_27 {dimension_numbers = #tpu.dot_dimension_numbers<[1], [0], [0], [1], [0, 0, 1, 1], [], []>} : vector<144x4xf32>, vector<4x128xf32>, vector<144x128xf32> -> vector<144x128xf32>
    %30 = arith.addf %24, %29 : vector<144x128xf32>
    %c0_28 = arith.constant 0 : index
    %c20 = arith.constant 20 : index
    %c0_29 = arith.constant 0 : index
    %31 = vector.load %arg1[%c0_28, %c20, %c0_29] : memref<1x182x4xf32, #tpu.memory_space<vmem>>, vector<1x144x4xf32>
    %32 = vector.shape_cast %31 : vector<1x144x4xf32> to vector<144x4xf32>
    %c5 = arith.constant 5 : index
    %c0_30 = arith.constant 0 : index
    %c0_31 = arith.constant 0 : index
    %33 = vector.load %arg2[%c5, %c0_30, %c0_31] : memref<9x4x128xf32, #tpu.memory_space<vmem>>, vector<1x4x128xf32>
    %34 = vector.shape_cast %33 : vector<1x4x128xf32> to vector<4x128xf32>
    %cst_32 = arith.constant dense<0.000000e+00> : vector<144x128xf32>
    %35 = tpu.matmul %32, %34, %cst_32 {dimension_numbers = #tpu.dot_dimension_numbers<[1], [0], [0], [1], [0, 0, 1, 1], [], []>} : vector<144x4xf32>, vector<4x128xf32>, vector<144x128xf32> -> vector<144x128xf32>
    %36 = arith.addf %30, %35 : vector<144x128xf32>
    %c0_33 = arith.constant 0 : index
    %c36 = arith.constant 36 : index
    %c0_34 = arith.constant 0 : index
    %37 = vector.load %arg1[%c0_33, %c36, %c0_34] : memref<1x182x4xf32, #tpu.memory_space<vmem>>, vector<1x144x4xf32>
    %38 = vector.shape_cast %37 : vector<1x144x4xf32> to vector<144x4xf32>
    %c6 = arith.constant 6 : index
    %c0_35 = arith.constant 0 : index
    %c0_36 = arith.constant 0 : index
    %39 = vector.load %arg2[%c6, %c0_35, %c0_36] : memref<9x4x128xf32, #tpu.memory_space<vmem>>, vector<1x4x128xf32>
    %40 = vector.shape_cast %39 : vector<1x4x128xf32> to vector<4x128xf32>
    %cst_37 = arith.constant dense<0.000000e+00> : vector<144x128xf32>
    %41 = tpu.matmul %38, %40, %cst_37 {dimension_numbers = #tpu.dot_dimension_numbers<[1], [0], [0], [1], [0, 0, 1, 1], [], []>} : vector<144x4xf32>, vector<4x128xf32>, vector<144x128xf32> -> vector<144x128xf32>
    %42 = arith.addf %36, %41 : vector<144x128xf32>
    %c0_38 = arith.constant 0 : index
    %c37 = arith.constant 37 : index
    %c0_39 = arith.constant 0 : index
    %43 = vector.load %arg1[%c0_38, %c37, %c0_39] : memref<1x182x4xf32, #tpu.memory_space<vmem>>, vector<1x144x4xf32>
    %44 = vector.shape_cast %43 : vector<1x144x4xf32> to vector<144x4xf32>
    %c7 = arith.constant 7 : index
    %c0_40 = arith.constant 0 : index
    %c0_41 = arith.constant 0 : index
    %45 = vector.load %arg2[%c7, %c0_40, %c0_41] : memref<9x4x128xf32, #tpu.memory_space<vmem>>, vector<1x4x128xf32>
    %46 = vector.shape_cast %45 : vector<1x4x128xf32> to vector<4x128xf32>
    %cst_42 = arith.constant dense<0.000000e+00> : vector<144x128xf32>
    %47 = tpu.matmul %44, %46, %cst_42 {dimension_numbers = #tpu.dot_dimension_numbers<[1], [0], [0], [1], [0, 0, 1, 1], [], []>} : vector<144x4xf32>, vector<4x128xf32>, vector<144x128xf32> -> vector<144x128xf32>
    %48 = arith.addf %42, %47 : vector<144x128xf32>
    %c0_43 = arith.constant 0 : index
    %c38 = arith.constant 38 : index
    %c0_44 = arith.constant 0 : index
    %49 = vector.load %arg1[%c0_43, %c38, %c0_44] : memref<1x182x4xf32, #tpu.memory_space<vmem>>, vector<1x144x4xf32>
    %50 = vector.shape_cast %49 : vector<1x144x4xf32> to vector<144x4xf32>
    %c8 = arith.constant 8 : index
    %c0_45 = arith.constant 0 : index
    %c0_46 = arith.constant 0 : index
    %51 = vector.load %arg2[%c8, %c0_45, %c0_46] : memref<9x4x128xf32, #tpu.memory_space<vmem>>, vector<1x4x128xf32>
    %52 = vector.shape_cast %51 : vector<1x4x128xf32> to vector<4x128xf32>
    %cst_47 = arith.constant dense<0.000000e+00> : vector<144x128xf32>
    %53 = tpu.matmul %50, %52, %cst_47 {dimension_numbers = #tpu.dot_dimension_numbers<[1], [0], [0], [1], [0, 0, 1, 1], [], []>} : vector<144x4xf32>, vector<4x128xf32>, vector<144x128xf32> -> vector<144x128xf32>
    %54 = arith.addf %48, %53 : vector<144x128xf32>
    %c0_48 = arith.constant 0 : index
    %c0_49 = arith.constant 0 : index
    %c0_50 = arith.constant 0 : index
    %55 = vector.load %arg3[%c0_48, %c0_49, %c0_50] : memref<1x144x128xf32, #tpu.memory_space<vmem>>, vector<1x144x128xf32>
    %56 = vector.shape_cast %55 : vector<1x144x128xf32> to vector<144x128xf32>
    %57 = vector.shape_cast %54 : vector<144x128xf32> to vector<1x144x128xf32>
    tpu.vector_store %arg3[%c0_48, %c0_49, %c0_50], %57 {strides = array<i32>} : memref<1x144x128xf32, #tpu.memory_space<vmem>>, vector<1x144x128xf32>,
    %58 = tpu.iota {dimensions = array<i32: 0>} : vector<144x1xi32>
    %c18_i32 = arith.constant 18 : i32
    %c0_i32 = arith.constant 0 : i32
    %59 = arith.cmpi eq, %c18_i32, %c0_i32 : i32
    %c1_i32 = arith.constant 1 : i32
    %60 = arith.select %59, %c1_i32, %c18_i32 : i32
    %61 = vector.broadcast %60 : i32 to vector<144x1xi32>
    %62 = arith.remsi %58, %61 : vector<144x1xi32>
    %c0_i32_51 = arith.constant 0 : i32
    %63 = vector.broadcast %c0_i32_51 : i32 to vector<144x1xi32>
    %64 = arith.cmpi ne, %62, %63 : vector<144x1xi32>
    %c0_i32_52 = arith.constant 0 : i32
    %65 = vector.broadcast %c0_i32_52 : i32 to vector<144x1xi32>
    %66 = arith.cmpi slt, %62, %65 : vector<144x1xi32>
    %c0_i32_53 = arith.constant 0 : i32
    %67 = arith.cmpi slt, %60, %c0_i32_53 : i32
    %68 = vector.broadcast %67 : i1 to vector<144x1xi1>
    %69 = vector.broadcast %68 : vector<144x1xi1> to vector<144x1xi1>
    %70 = arith.xori %66, %69 : vector<144x1xi1>
    %71 = arith.andi %70, %64 : vector<144x1xi1>
    %72 = vector.broadcast %60 : i32 to vector<144x1xi32>
    %73 = arith.addi %62, %72 : vector<144x1xi32>
    %74 = arith.select %71, %73, %62 : vector<144x1xi1>, vector<144x1xi32>
    %c16_i32 = arith.constant 16 : i32
    %75 = vector.broadcast %c16_i32 : i32 to vector<144x1xi32>
    %76 = arith.cmpi slt, %74, %75 : vector<144x1xi32>
    %77 = arith.extui %76 : vector<144x1xi1> to vector<144x1xi32>
    %78 = arith.sitofp %77 : vector<144x1xi32> to vector<144x1xf32>
    %79 = vector.broadcast %78 : vector<144x1xf32> to vector<144x128xf32>
    %80 = arith.mulf %54, %79 : vector<144x128xf32>
    %cst_54 = arith.constant dense<0.000000e+00> : vector<128xf32>
    %81 = vector.multi_reduction <add>, %80, %cst_54 [0] : vector<144x128xf32> to vector<128xf32>
    %82 = vector.shape_cast %81 : vector<128xf32> to vector<1x128xf32>
    %c0_55 = arith.constant 0 : index
    %c0_56 = arith.constant 0 : index
    %c0_57 = arith.constant 0 : index
    %83 = vector.load %arg4[%c0_55, %c0_56, %c0_57] : memref<1x2x128xf32, #tpu.memory_space<vmem>>, vector<1x1x128xf32>
    %84 = vector.shape_cast %83 : vector<1x1x128xf32> to vector<1x128xf32>
    %85 = vector.shape_cast %82 : vector<1x128xf32> to vector<1x1x128xf32>
    tpu.vector_store %arg4[%c0_55, %c0_56, %c0_57], %85 {strides = array<i32>} : memref<1x2x128xf32, #tpu.memory_space<vmem>>, vector<1x1x128xf32>,
    %86 = arith.mulf %54, %54 : vector<144x128xf32>
    %87 = vector.broadcast %78 : vector<144x1xf32> to vector<144x128xf32>
    %88 = arith.mulf %86, %87 : vector<144x128xf32>
    %cst_58 = arith.constant dense<0.000000e+00> : vector<128xf32>
    %89 = vector.multi_reduction <add>, %88, %cst_58 [0] : vector<144x128xf32> to vector<128xf32>
    %90 = vector.shape_cast %89 : vector<128xf32> to vector<1x128xf32>
    %c0_59 = arith.constant 0 : index
    %c1_60 = arith.constant 1 : index
    %c0_61 = arith.constant 0 : index
    %91 = vector.load %arg4[%c0_59, %c1_60, %c0_61] : memref<1x2x128xf32, #tpu.memory_space<vmem>>, vector<1x1x128xf32>
    %92 = vector.shape_cast %91 : vector<1x1x128xf32> to vector<1x128xf32>
    %93 = vector.shape_cast %90 : vector<1x128xf32> to vector<1x1x128xf32>
    tpu.vector_store %arg4[%c0_59, %c1_60, %c0_61], %93 {strides = array<i32>} : memref<1x2x128xf32, #tpu.memory_space<vmem>>, vector<1x1x128xf32>,
    return
  }
  func.func @transform_0(%arg0: i32) -> (i32, i32, i32) {
    %c0_i32 = arith.constant 0 : i32
    %c0_i32_0 = arith.constant 0 : i32
    %c0_i32_1 = arith.constant 0 : i32
    return %arg0, %c0_i32, %c0_i32_0 : i32, i32, i32
  }
  func.func @transform_1(%arg0: i32) -> (i32, i32, i32) {
    %c0_i32 = arith.constant 0 : i32
    %c0_i32_0 = arith.constant 0 : i32
    %c0_i32_1 = arith.constant 0 : i32
    %c0_i32_2 = arith.constant 0 : i32
    return %c0_i32, %c0_i32_0, %c0_i32_1 : i32, i32, i32
  }
  func.func @transform_2(%arg0: i32) -> (i32, i32, i32) {
    %c0_i32 = arith.constant 0 : i32
    %c0_i32_0 = arith.constant 0 : i32
    %c0_i32_1 = arith.constant 0 : i32
    return %arg0, %c0_i32, %c0_i32_0 : i32, i32, i32
  }
  func.func @transform_3(%arg0: i32) -> (i32, i32, i32) {
    %c0_i32 = arith.constant 0 : i32
    %c0_i32_0 = arith.constant 0 : i32
    %c0_i32_1 = arith.constant 0 : i32
    return %arg0, %c0_i32, %c0_i32_0 : i32, i32, i32
  }
}

</mosaic_0001>

<llo_original>
// kernel: tpu_custom_call.1
$region0: #{tpu_custom_call.1}
  #allocation0 [shape = 'u32[]', space=smem, size = 0x4, offset = 0x4, fixed_abs, tag = 'smem constant byte address 0x4 - core index']
  #allocation1 [shape = 'u32[144,128]{1,0:T(1,128)}', space=vmem, size = 0x12000, scoped, tag = 'internal scratch']
  %s0 = inlined_call_operand.vmem [shape: f32[4,182,4], index: 0, kind: input, shape index: {}]
  %s1 = inlined_call_operand.vmem [shape: f32[9,4,128], index: 1, kind: input, shape index: {}]
  %s2 = inlined_call_operand.hbm [shape: f32[4,144,128], index: 2, kind: output, shape index: {0}]
  %s3 = inlined_call_operand.hbm [shape: f32[4,2,128], index: 3, kind: output, shape index: {1}]
  %4 = xla_tuple %s2, %s3
  %s5 = sld [smem:[#allocation0]]
  $region49: #{tpu_custom_call.1} parent=0
    _
  %s7 = ssub.s32 1, %s5
  %s8 = scalar_select 0, %s7, %s5
  $region1: #{tpu_custom_call.1} parent=0
    #allocation2 [shape = 'u8[147456]{0}', space=vmem, size = 0x24000, scoped, tag = 'output window, operand 0']
    #allocation3 [shape = 's32[2]{0}', space=sflag, size = 0x8, scoped, tag = 'scoped memory for tpu_custom_call.1']
    #allocation4 [shape = 'u8[2048]{0}', space=vmem, size = 0x800, scoped, tag = 'output window, operand 1']
    #allocation5 [shape = 's32[2]{0}', space=sflag, size = 0x8, scoped, tag = 'scoped memory for tpu_custom_call.1']
    %9 = vsyncpa [#allocation3], 0
    %s10 = scalar_lea.sflag [#allocation3], 1
    %11 = vsyncpa %s10, 0
    %12 = vsyncpa [#allocation5], 0
    %s13 = scalar_lea.sflag [#allocation5], 1
    %14 = vsyncpa %s13, 0
    loop: start=0, step=1, limit=6
    $region2: #{tpu_custom_call.1} parent=1 // loop_pre_header
      _
    $region3: #{tpu_custom_call.1} parent=1 // loop_header
      %s16 = sphi 0, %s20
      %p17 = scmp.ge.s32.totalorder %s16, 6
      %s26 = sphi 0, %s28
      %s29 = sphi 0, %s26
      %s30 = sphi 0, %s29
      %s46 = sphi 0, %s30
      %s50 = sphi 0, %s50
      %s52 = sphi 0, %s50
      %s53 = sphi 0, %s52
      %s67 = sphi 0, %s53
      %s73 = sphi 0, %s75
      %s76 = sphi 0, %s73
      %s77 = sphi 0, %s76
      %s93 = sphi 0, %s77
      %s99 = sphi 0, %s101
      %s102 = sphi 0, %s99
      %s103 = sphi 0, %s102
      %s119 = sphi 0, %s103
    $region4: #{tpu_custom_call.1} parent=1 // loop_header_branch
      %19 = sbr.rel (%p17) target = $region8
    $region5: #{tpu_custom_call.1} parent=1 // loop_body
      %s21 = ssub.s32 %s16, 1
      %s22 = ssub.s32 %s16, 2
      %s23 = sadd.s32 %s16, 1
      %s24 = ssub.s32 %s16, %s23
      %p25 = scmp.eq.s32.totalorder %s24, 0
      %s27 = sadd.s32 %s26, 1
      %s28 = scalar_select %p25, %s26, %s27
      %p31 = pneg %p25
      %p32 = scmp.eq.s32.totalorder %s16, 3
      %p33 = por %p31, %p32
      %p34 = scmp.ne.s32.totalorder %s26, %s29
      %p35 = scmp.eq.s32.totalorder %s16, 0
      %p36 = por %p34, %p35
      %p37 = scmp.ne.s32.totalorder %s26, %s29
      %p38 = scmp.eq.s32.totalorder %s21, 3
      %p39 = por %p37, %p38
      %p40 = scmp.ne.s32.totalorder %s29, %s30
      %p41 = scmp.eq.s32.totalorder %s21, 0
      %p42 = por %p40, %p41
      %p43 = scmp.ne.s32.totalorder %s29, %s30
      %p44 = scmp.eq.s32.totalorder %s22, 3
      %p45 = por %p43, %p44
      %p47 = scmp.ne.s32.totalorder %s30, %s46
      %p48 = scmp.eq.s32.totalorder %s22, 0
      %p49 = por %p47, %p48
      %s51 = sadd.s32 %s50, 1
      %p54 = scmp.eq.s32.totalorder %s16, 3
      %p55 = scmp.ne.s32.totalorder %s50, %s52
      %p56 = scmp.eq.s32.totalorder %s16, 0
      %p57 = por %p55, %p56
      %p58 = scmp.ne.s32.totalorder %s50, %s52
      %p59 = scmp.eq.s32.totalorder %s21, 3
      %p60 = por %p58, %p59
      %p61 = scmp.ne.s32.totalorder %s52, %s53
      %p62 = scmp.eq.s32.totalorder %s21, 0
      %p63 = por %p61, %p62
      %p64 = scmp.ne.s32.totalorder %s52, %s53
      %p65 = scmp.eq.s32.totalorder %s22, 3
      %p66 = por %p64, %p65
      %p68 = scmp.ne.s32.totalorder %s53, %s67
      %p69 = scmp.eq.s32.totalorder %s22, 0
      %p70 = por %p68, %p69
      %s71 = ssub.s32 %s16, %s23
      %p72 = scmp.eq.s32.totalorder %s71, 0
      %s74 = sadd.s32 %s73, 1
      %s75 = scalar_select %p72, %s73, %s74
      %p78 = pneg %p72
      %p79 = scmp.eq.s32.totalorder %s16, 3
      %p80 = por %p78, %p79
      %p81 = scmp.ne.s32.totalorder %s73, %s76
      %p82 = scmp.eq.s32.totalorder %s16, 0
      %p83 = por %p81, %p82
      %p84 = scmp.ne.s32.totalorder %s73, %s76
      %p85 = scmp.eq.s32.totalorder %s21, 3
      %p86 = por %p84, %p85
      %p87 = scmp.ne.s32.totalorder %s76, %s77
      %p88 = scmp.eq.s32.totalorder %s21, 0
      %p89 = por %p87, %p88
      %p90 = scmp.ne.s32.totalorder %s76, %s77
      %p91 = scmp.eq.s32.totalorder %s22, 3
      %p92 = por %p90, %p91
      %p94 = scmp.ne.s32.totalorder %s77, %s93
      %p95 = scmp.eq.s32.totalorder %s22, 0
      %p96 = por %p94, %p95
      %s97 = ssub.s32 %s16, %s23
      %p98 = scmp.eq.s32.totalorder %s97, 0
      %s100 = sadd.s32 %s99, 1
      %s101 = scalar_select %p98, %s99, %s100
      %p104 = pneg %p98
      %p105 = scmp.eq.s32.totalorder %s16, 3
      %p106 = por %p104, %p105
      %p107 = scmp.ne.s32.totalorder %s99, %s102
      %p108 = scmp.eq.s32.totalorder %s16, 0
      %p109 = por %p107, %p108
      %p110 = scmp.ne.s32.totalorder %s99, %s102
      %p111 = scmp.eq.s32.totalorder %s21, 3
      %p112 = por %p110, %p111
      %p113 = scmp.ne.s32.totalorder %s102, %s103
      %p114 = scmp.eq.s32.totalorder %s21, 0
      %p115 = por %p113, %p114
      %p116 = scmp.ne.s32.totalorder %s102, %s103
      %p117 = scmp.eq.s32.totalorder %s22, 3
      %p118 = por %p116, %p117
      %p120 = scmp.ne.s32.totalorder %s103, %s119
      %p121 = scmp.eq.s32.totalorder %s22, 0
      %p122 = por %p120, %p121
      %p123 = scmp.le.s32.totalorder 1, %s16
      %p124 = scmp.lt.s32.totalorder %s16, 5
      %p125 = pnand %p123, %p124
      %p126 = pneg %p125
      // Predicated region
      $region9: #{tpu_custom_call.1} parent=5 // pred_check
        _
      $region10: #{tpu_custom_call.1} parent=5 // pred_check_branch
        %128 = sbr.rel (%p125) target = $region12
      $region11: #{tpu_custom_call.1} parent=5 // pred_region
        %s129 = ssub.s32 %s16, 1
        // Predicated region
        $region13: #{tpu_custom_call.1} parent=11 // pred_check
          %p130 = pneg %p63
        $region14: #{tpu_custom_call.1} parent=11 // pred_check_branch
          %132 = sbr.rel (%p130) target = $region16
        $region15: #{tpu_custom_call.1} parent=11 // pred_region
          _
        $region16: #{tpu_custom_call.1} parent=11 // pred_fallthru
          _
      $region12: #{tpu_custom_call.1} parent=5 // pred_fallthru
        _
      %p133 = scmp.lt.s32.totalorder %s16, 4
      // Predicated region
      $region17: #{tpu_custom_call.1} parent=5 // pred_check
        %p134 = pneg %p133
      $region18: #{tpu_custom_call.1} parent=5 // pred_check_branch
        %136 = sbr.rel (%p134) target = $region20
      $region19: #{tpu_custom_call.1} parent=5 // pred_region
        // Predicated region
        $region21: #{tpu_custom_call.1} parent=19 // pred_check
          %p137 = pneg %p36
        $region22: #{tpu_custom_call.1} parent=19 // pred_check_branch
          %139 = sbr.rel (%p137) target = $region24
        $region23: #{tpu_custom_call.1} parent=19 // pred_region
          %p140 = scmp.lt.s32.totalorder %s16, 3
          %s141 = scalar_select %p140, %s16, 3
          %s142 = smul.addr %s141, 23
          %s143 = smul.addr %s142, 8
          %s144 = scalar_lea.vmem %s0, %s143
        $region24: #{tpu_custom_call.1} parent=19 // pred_fallthru
          _
      $region20: #{tpu_custom_call.1} parent=5 // pred_fallthru
        _
      %p145 = scmp.le.s32.totalorder 1, %s16
      %p146 = scmp.lt.s32.totalorder %s16, 5
      %p147 = pnand %p145, %p146
      %p148 = pneg %p147
      // Predicated region
      $region25: #{tpu_custom_call.1} parent=5 // pred_check
        _
      $region26: #{tpu_custom_call.1} parent=5 // pred_check_branch
        %150 = sbr.rel (%p147) target = $region28
      $region27: #{tpu_custom_call.1} parent=5 // pred_region
        %s151 = ssub.s32 %s16, 1
        %p152 = scmp.lt.s32.totalorder %s21, 3
        %s153 = scalar_select %p152, %s21, 3
        %s154 = smul.addr %s153, 23
        %s155 = smul.addr %s154, 8
        %s156 = scalar_lea.vmem %s0, %s155
        %p157 = pneg %p42
        %p158 = pneg %p39
        %p159 = pneg %p63
        %p160 = pneg %p60
        %p161 = pneg %p89
        %p162 = pneg %p86
        %s163 = sand.u32 %s76, 1
        %s164 = scalar_lea.sflag [#allocation3], %s163
        %s165 = sand.u32 %s76, 1
        %s166 = smul.addr %s165, 144
        %s167 = scalar_lea.vmem [#allocation2], %s166
        %p168 = pneg %p115
        %p169 = pneg %p112
        %s170 = sand.u32 %s102, 1
        %s171 = scalar_lea.sflag [#allocation5], %s170
        %s172 = sand.u32 %s102, 1
        %s173 = smul.addr %s172, 2
        %s174 = scalar_lea.vmem [#allocation4], %s173
        %p175 = scmp.lt.s32.totalorder %s21, 3
        %s176 = scalar_select %p175, %s21, 3
        %s177 = smul.addr %s176, 23
        %s178 = smul.addr %s177, 8
        %s179 = scalar_lea.vmem %s0, %s178
        %v180 = vld [vmem:[%s179] sm:$0xff]
        %v181 = vld [vmem:[%s179 + $0x8] sm:$0xff]
        %v182 = vld [vmem:[%s179 + $0x10] sm:$0xff]
        %v183 = vld [vmem:[%s179 + $0x18] sm:$0xff]
        %v184 = vld [vmem:[%s179 + $0x20] sm:$0xff]
        %v185 = vld [vmem:[%s179 + $0x28] sm:$0xff]
        %v186 = vld [vmem:[%s179 + $0x30] sm:$0xff]
        %v187 = vld [vmem:[%s179 + $0x38] sm:$0xff]
        %v188 = vld [vmem:[%s179 + $0x40] sm:$0xff]
        %v189 = vld [vmem:[%s179 + $0x48] sm:$0xff]
        %v190 = vld [vmem:[%s179 + $0x50] sm:$0xff]
        %v191 = vld [vmem:[%s179 + $0x58] sm:$0xff]
        %v192 = vld [vmem:[%s179 + $0x60] sm:$0xff]
        %v193 = vld [vmem:[%s179 + $0x68] sm:$0xff]
        %v194 = vld [vmem:[%s179 + $0x70] sm:$0xff]
        %v195 = vld [vmem:[%s179 + $0x78] sm:$0xff]
        %v196 = vld [vmem:[%s179 + $0x80] sm:$0xff]
        %v197 = vld [vmem:[%s179 + $0x88] sm:$0xff]
        %v198 = vld [vmem:[%s1] sm:$0xf]
        %v199 = vld [vmem:[%s179 + $0x1] sm:$0xff]
        %v200 = vld [vmem:[%s179 + $0x9] sm:$0xff]
        %v201 = vld [vmem:[%s179 + $0x11] sm:$0xff]
        %v202 = vld [vmem:[%s179 + $0x19] sm:$0xff]
        %v203 = vld [vmem:[%s179 + $0x21] sm:$0xff]
        %v204 = vld [vmem:[%s179 + $0x29] sm:$0xff]
        %v205 = vld [vmem:[%s179 + $0x31] sm:$0xff]
        %v206 = vld [vmem:[%s179 + $0x39] sm:$0xff]
        %v207 = vld [vmem:[%s179 + $0x41] sm:$0xff]
        %v208 = vld [vmem:[%s179 + $0x49] sm:$0xff]
        %v209 = vld [vmem:[%s179 + $0x51] sm:$0xff]
        %v210 = vld [vmem:[%s179 + $0x59] sm:$0xff]
        %v211 = vld [vmem:[%s179 + $0x61] sm:$0xff]
        %v212 = vld [vmem:[%s179 + $0x69] sm:$0xff]
        %v213 = vld [vmem:[%s179 + $0x71] sm:$0xff]
        %v214 = vld [vmem:[%s179 + $0x79] sm:$0xff]
        %v215 = vld [vmem:[%s179 + $0x81] sm:$0xff]
        %v216 = vld [vmem:[%s179 + $0x89] sm:$0xff]
        %s217 = scalar_lea.vmem %s1, 4
        %v218 = vld [vmem:[%s217] sm:$0xf]
        %vm219 = vcmask 31744
        %v221 = vsel %vm219, %v199, 0
        %v224 = vsel %vm219, %v200, 0
        %v227 = vsel %vm219, %v201, 0
        %v230 = vsel %vm219, %v202, 0
        %v233 = vsel %vm219, %v203, 0
        %v236 = vsel %vm219, %v204, 0
        %v239 = vsel %vm219, %v205, 0
        %v242 = vsel %vm219, %v206, 0
        %v245 = vsel %vm219, %v207, 0
        %v248 = vsel %vm219, %v208, 0
        %v251 = vsel %vm219, %v209, 0
        %v254 = vsel %vm219, %v210, 0
        %v257 = vsel %vm219, %v211, 0
        %v260 = vsel %vm219, %v212, 0
        %v263 = vsel %vm219, %v213, 0
        %v266 = vsel %vm219, %v214, 0
        %v269 = vsel %vm219, %v215, 0
        %v272 = vsel %vm219, %v216, 0
        %vm274 = vcmask 1043456
        %v276 = vsel %vm274, %v218, 0
        %278 = vmatprep.subr.mxu0 0.0
        %279 = vmatpush1.msra.mxu0 0.0
        %280 = vmatprep.subr.mxu0 0.0
        %281 = vmatpush1.msra.mxu0 0.0
        %282 = vmatprep.subr.mxu0 0.0
        %283 = vmatpush1.msra.mxu0 0.0
        %284 = vmatprep.subr.mxu0 0.0
        %285 = vmatpush1.msra.mxu0 0.0
        %286 = vmatprep.subr.mxu0 0.0
        %287 = vmatpush1.msra.mxu0 0.0
        %288 = vmatprep.subr.mxu0 0.0
        %289 = vmatpush1.msra.mxu0 0.0
        %290 = vmatprep.subr.mxu0 0.0
        %291 = vmatpush1.msra.mxu0 0.0
        %292 = vmatprep.subr.mxu0 0.0
        %293 = vmatpush1.msra.mxu0 0.0
        %294 = vmatprep.subr.mxu0 0.0
        %295 = vmatpush1.msra.mxu0 0.0
        %296 = vmatprep.subr.mxu0 0.0
        %297 = vmatpush1.msra.mxu0 0.0
        %298 = vmatprep.subr.mxu0 0.0
        %299 = vmatpush1.msra.mxu0 0.0
        %300 = vmatprep.subr.mxu0 0.0
        %301 = vmatpush1.msra.mxu0 0.0
        %302 = vmatprep.subr.mxu0 0.0
        %303 = vmatpush1.msra.mxu0 0.0
        %304 = vmatprep.subr.mxu0 0.0
        %305 = vmatpush1.msra.mxu0 0.0
        %306 = vmatprep.subr.mxu0 0.0
        %307 = vmatpush1.msra.mxu0 0.0
        %308 = vmatprep.subr.mxu0 0.0
        %309 = vmatpush1.msra.mxu0 %v276
        %310 = vmatprep.subr.mxu0 0.0
        %311 = vmatpush2.msra.mxu0 0.0
        %312 = vmatprep.subr.mxu0 0.0
        %313 = vmatpush2.msra.mxu0 0.0
        %314 = vmatprep.subr.mxu0 0.0
        %315 = vmatpush2.msra.mxu0 0.0
        %316 = vmatprep.subr.mxu0 0.0
        %317 = vmatpush2.msra.mxu0 0.0
        %318 = vmatprep.subr.mxu0 0.0
        %319 = vmatpush2.msra.mxu0 0.0
        %320 = vmatprep.subr.mxu0 0.0
        %321 = vmatpush2.msra.mxu0 0.0
        %322 = vmatprep.subr.mxu0 0.0
        %323 = vmatpush2.msra.mxu0 0.0
        %324 = vmatprep.subr.mxu0 0.0
        %325 = vmatpush2.msra.mxu0 0.0
        %326 = vmatprep.subr.mxu0 0.0
        %327 = vmatpush2.msra.mxu0 0.0
        %328 = vmatprep.subr.mxu0 0.0
        %329 = vmatpush2.msra.mxu0 0.0
        %330 = vmatprep.subr.mxu0 0.0
        %331 = vmatpush2.msra.mxu0 0.0
        %332 = vmatprep.subr.mxu0 0.0
        %333 = vmatpush2.msra.mxu0 0.0
        %334 = vmatprep.subr.mxu0 0.0
        %335 = vmatpush2.msra.mxu0 0.0
        %336 = vmatprep.subr.mxu0 0.0
        %337 = vmatpush2.msra.mxu0 0.0
        %338 = vmatprep.subr.mxu0 0.0
        %339 = vmatpush2.msra.mxu0 0.0
        %340 = vmatprep.subr.mxu0 0.0
        %341 = vmatpush2.msra.mxu0 0.0
        %342 = vmatprep.mubr.f32.mxu0 0.0
        %343 = vmatmul.mubr.f32.gmra.mxu0 %v221
        %v344 = vpop.f32.mrf.mxu0
        %v345 = vadd.f32 0.0, %v344
        %v346 = vpop.f32.mrf.mxu0
        %347 = vmatprep.mubr.f32.mxu0 0.0
        %348 = vmatmul.mubr.f32.gmra.mxu0 %v224
        %v349 = vpop.f32.mrf.mxu0
        %v350 = vadd.f32 0.0, %v349
        %v351 = vpop.f32.mrf.mxu0
        %352 = vmatprep.mubr.f32.mxu0 0.0
        %353 = vmatmul.mubr.f32.gmra.mxu0 %v227
        %v354 = vpop.f32.mrf.mxu0
        %v355 = vadd.f32 0.0, %v354
        %v356 = vpop.f32.mrf.mxu0
        %357 = vmatprep.mubr.f32.mxu0 0.0
        %358 = vmatmul.mubr.f32.gmra.mxu0 %v230
        %v359 = vpop.f32.mrf.mxu0
        %v360 = vadd.f32 0.0, %v359
        %v361 = vpop.f32.mrf.mxu0
        %362 = vmatprep.mubr.f32.mxu0 0.0
        %363 = vmatmul.mubr.f32.gmra.mxu0 %v233
        %v364 = vpop.f32.mrf.mxu0
        %v365 = vadd.f32 0.0, %v364
        %v366 = vpop.f32.mrf.mxu0
        %367 = vmatprep.mubr.f32.mxu0 0.0
        %368 = vmatmul.mubr.f32.gmra.mxu0 %v236
        %v369 = vpop.f32.mrf.mxu0
        %v370 = vadd.f32 0.0, %v369
        %v371 = vpop.f32.mrf.mxu0
        %372 = vmatprep.mubr.f32.mxu0 0.0
        %373 = vmatmul.mubr.f32.gmra.mxu0 %v239
        %v374 = vpop.f32.mrf.mxu0
        %v375 = vadd.f32 0.0, %v374
        %v376 = vpop.f32.mrf.mxu0
        %377 = vmatprep.mubr.f32.mxu0 0.0
        %378 = vmatmul.mubr.f32.gmra.mxu0 %v242
        %v379 = vpop.f32.mrf.mxu0
        %v380 = vadd.f32 0.0, %v379
        %v381 = vpop.f32.mrf.mxu0
        %382 = vmatprep.mubr.f32.mxu0 0.0
        %383 = vmatmul.mubr.f32.gmra.mxu0 %v245
        %v384 = vpop.f32.mrf.mxu0
        %v385 = vadd.f32 0.0, %v384
        %v386 = vpop.f32.mrf.mxu0
        %387 = vmatprep.mubr.f32.mxu0 0.0
        %388 = vmatmul.mubr.f32.gmra.mxu0 %v248
        %v389 = vpop.f32.mrf.mxu0
        %v390 = vadd.f32 0.0, %v389
        %v391 = vpop.f32.mrf.mxu0
        %392 = vmatprep.mubr.f32.mxu0 0.0
        %393 = vmatmul.mubr.f32.gmra.mxu0 %v251
        %v394 = vpop.f32.mrf.mxu0
        %v395 = vadd.f32 0.0, %v394
        %v396 = vpop.f32.mrf.mxu0
        %397 = vmatprep.mubr.f32.mxu0 0.0
        %398 = vmatmul.mubr.f32.gmra.mxu0 %v254
        %v399 = vpop.f32.mrf.mxu0
        %v400 = vadd.f32 0.0, %v399
        %v401 = vpop.f32.mrf.mxu0
        %402 = vmatprep.mubr.f32.mxu0 0.0
        %403 = vmatmul.mubr.f32.gmra.mxu0 %v257
        %v404 = vpop.f32.mrf.mxu0
        %v405 = vadd.f32 0.0, %v404
        %v406 = vpop.f32.mrf.mxu0
        %407 = vmatprep.mubr.f32.mxu0 0.0
        %408 = vmatmul.mubr.f32.gmra.mxu0 %v260
        %v409 = vpop.f32.mrf.mxu0
        %v410 = vadd.f32 0.0, %v409
        %v411 = vpop.f32.mrf.mxu0
        %412 = vmatprep.mubr.f32.mxu0 0.0
        %413 = vmatmul.mubr.f32.gmra.mxu0 %v263
        %v414 = vpop.f32.mrf.mxu0
        %v415 = vadd.f32 0.0, %v414
        %v416 = vpop.f32.mrf.mxu0
        %417 = vmatprep.mubr.f32.mxu0 0.0
        %418 = vmatmul.mubr.f32.gmra.mxu0 %v266
        %v419 = vpop.f32.mrf.mxu0
        %v420 = vadd.f32 0.0, %v419
        %v421 = vpop.f32.mrf.mxu0
        %422 = vmatprep.mubr.f32.mxu0 0.0
        %423 = vmatmul.mubr.f32.gmra.mxu0 %v269
        %v424 = vpop.f32.mrf.mxu0
        %v425 = vadd.f32 0.0, %v424
        %v426 = vpop.f32.mrf.mxu0
        %427 = vmatprep.mubr.f32.mxu0 0.0
        %428 = vmatmul.mubr.f32.gmra.mxu0 %v272
        %v429 = vpop.f32.mrf.mxu0
        %v430 = vadd.f32 0.0, %v429
        %v431 = vpop.f32.mrf.mxu0
        %432 = vdwg.mxu0
        %v434 = vsel %vm219, %v180, 0
        %v437 = vsel %vm219, %v181, 0
        %v440 = vsel %vm219, %v182, 0
        %v443 = vsel %vm219, %v183, 0
        %v446 = vsel %vm219, %v184, 0
        %v449 = vsel %vm219, %v185, 0
        %v452 = vsel %vm219, %v186, 0
        %v455 = vsel %vm219, %v187, 0
        %v458 = vsel %vm219, %v188, 0
        %v461 = vsel %vm219, %v189, 0
        %v464 = vsel %vm219, %v190, 0
        %v467 = vsel %vm219, %v191, 0
        %v470 = vsel %vm219, %v192, 0
        %v473 = vsel %vm219, %v193, 0
        %v476 = vsel %vm219, %v194, 0
        %v479 = vsel %vm219, %v195, 0
        %v482 = vsel %vm219, %v196, 0
        %v485 = vsel %vm219, %v197, 0
        %v488 = vsel %vm274, %v198, 0
        %490 = vmatprep.subr.mxu0 0.0
        %491 = vmatpush1.msra.mxu0 0.0
        %492 = vmatprep.subr.mxu0 0.0
        %493 = vmatpush1.msra.mxu0 0.0
        %494 = vmatprep.subr.mxu0 0.0
        %495 = vmatpush1.msra.mxu0 0.0
        %496 = vmatprep.subr.mxu0 0.0
        %497 = vmatpush1.msra.mxu0 0.0
        %498 = vmatprep.subr.mxu0 0.0
        %499 = vmatpush1.msra.mxu0 0.0
        %500 = vmatprep.subr.mxu0 0.0
        %501 = vmatpush1.msra.mxu0 0.0
        %502 = vmatprep.subr.mxu0 0.0
        %503 = vmatpush1.msra.mxu0 0.0
        %504 = vmatprep.subr.mxu0 0.0
        %505 = vmatpush1.msra.mxu0 0.0
        %506 = vmatprep.subr.mxu0 0.0
        %507 = vmatpush1.msra.mxu0 0.0
        %508 = vmatprep.subr.mxu0 0.0
        %509 = vmatpush1.msra.mxu0 0.0
        %510 = vmatprep.subr.mxu0 0.0
        %511 = vmatpush1.msra.mxu0 0.0
        %512 = vmatprep.subr.mxu0 0.0
        %513 = vmatpush1.msra.mxu0 0.0
        %514 = vmatprep.subr.mxu0 0.0
        %515 = vmatpush1.msra.mxu0 0.0
        %516 = vmatprep.subr.mxu0 0.0
        %517 = vmatpush1.msra.mxu0 0.0
        %518 = vmatprep.subr.mxu0 0.0
        %519 = vmatpush1.msra.mxu0 0.0
        %520 = vmatprep.subr.mxu0 0.0
        %521 = vmatpush1.msra.mxu0 %v488
        %522 = vmatprep.subr.mxu0 0.0
        %523 = vmatpush2.msra.mxu0 0.0
        %524 = vmatprep.subr.mxu0 0.0
        %525 = vmatpush2.msra.mxu0 0.0
        %526 = vmatprep.subr.mxu0 0.0
        %527 = vmatpush2.msra.mxu0 0.0
        %528 = vmatprep.subr.mxu0 0.0
        %529 = vmatpush2.msra.mxu0 0.0
        %530 = vmatprep.subr.mxu0 0.0
        %531 = vmatpush2.msra.mxu0 0.0
        %532 = vmatprep.subr.mxu0 0.0
        %533 = vmatpush2.msra.mxu0 0.0
        %534 = vmatprep.subr.mxu0 0.0
        %535 = vmatpush2.msra.mxu0 0.0
        %536 = vmatprep.subr.mxu0 0.0
        %537 = vmatpush2.msra.mxu0 0.0
        %538 = vmatprep.subr.mxu0 0.0
        %539 = vmatpush2.msra.mxu0 0.0
        %540 = vmatprep.subr.mxu0 0.0
        %541 = vmatpush2.msra.mxu0 0.0
        %542 = vmatprep.subr.mxu0 0.0
        %543 = vmatpush2.msra.mxu0 0.0
        %544 = vmatprep.subr.mxu0 0.0
        %545 = vmatpush2.msra.mxu0 0.0
        %546 = vmatprep.subr.mxu0 0.0
        %547 = vmatpush2.msra.mxu0 0.0
        %548 = vmatprep.subr.mxu0 0.0
        %549 = vmatpush2.msra.mxu0 0.0
        %550 = vmatprep.subr.mxu0 0.0
        %551 = vmatpush2.msra.mxu0 0.0
        %552 = vmatprep.subr.mxu0 0.0
        %553 = vmatpush2.msra.mxu0 0.0
        %554 = vmatprep.mubr.f32.mxu0 0.0
        %555 = vmatmul.mubr.f32.gmra.mxu0 %v434
        %v556 = vpop.f32.mrf.mxu0
        %v557 = vadd.f32 %v345, %v556
        %v558 = vpop.f32.mrf.mxu0
        %559 = vmatprep.mubr.f32.mxu0 0.0
        %560 = vmatmul.mubr.f32.gmra.mxu0 %v437
        %v561 = vpop.f32.mrf.mxu0
        %v562 = vadd.f32 %v350, %v561
        %v563 = vpop.f32.mrf.mxu0
        %564 = vmatprep.mubr.f32.mxu0 0.0
        %565 = vmatmul.mubr.f32.gmra.mxu0 %v440
        %v566 = vpop.f32.mrf.mxu0
        %v567 = vadd.f32 %v355, %v566
        %v568 = vpop.f32.mrf.mxu0
        %569 = vmatprep.mubr.f32.mxu0 0.0
        %570 = vmatmul.mubr.f32.gmra.mxu0 %v443
        %v571 = vpop.f32.mrf.mxu0
        %v572 = vadd.f32 %v360, %v571
        %v573 = vpop.f32.mrf.mxu0
        %574 = vmatprep.mubr.f32.mxu0 0.0
        %575 = vmatmul.mubr.f32.gmra.mxu0 %v446
        %v576 = vpop.f32.mrf.mxu0
        %v577 = vadd.f32 %v365, %v576
        %v578 = vpop.f32.mrf.mxu0
        %579 = vmatprep.mubr.f32.mxu0 0.0
        %580 = vmatmul.mubr.f32.gmra.mxu0 %v449
        %v581 = vpop.f32.mrf.mxu0
        %v582 = vadd.f32 %v370, %v581
        %v583 = vpop.f32.mrf.mxu0
        %584 = vmatprep.mubr.f32.mxu0 0.0
        %585 = vmatmul.mubr.f32.gmra.mxu0 %v452
        %v586 = vpop.f32.mrf.mxu0
        %v587 = vadd.f32 %v375, %v586
        %v588 = vpop.f32.mrf.mxu0
        %589 = vmatprep.mubr.f32.mxu0 0.0
        %590 = vmatmul.mubr.f32.gmra.mxu0 %v455
        %v591 = vpop.f32.mrf.mxu0
        %v592 = vadd.f32 %v380, %v591
        %v593 = vpop.f32.mrf.mxu0
        %594 = vmatprep.mubr.f32.mxu0 0.0
        %595 = vmatmul.mubr.f32.gmra.mxu0 %v458
        %v596 = vpop.f32.mrf.mxu0
        %v597 = vadd.f32 %v385, %v596
        %v598 = vpop.f32.mrf.mxu0
        %599 = vmatprep.mubr.f32.mxu0 0.0
        %600 = vmatmul.mubr.f32.gmra.mxu0 %v461
        %v601 = vpop.f32.mrf.mxu0
        %v602 = vadd.f32 %v390, %v601
        %v603 = vpop.f32.mrf.mxu0
        %604 = vmatprep.mubr.f32.mxu0 0.0
        %605 = vmatmul.mubr.f32.gmra.mxu0 %v464
        %v606 = vpop.f32.mrf.mxu0
        %v607 = vadd.f32 %v395, %v606
        %v608 = vpop.f32.mrf.mxu0
        %609 = vmatprep.mubr.f32.mxu0 0.0
        %610 = vmatmul.mubr.f32.gmra.mxu0 %v467
        %v611 = vpop.f32.mrf.mxu0
        %v612 = vadd.f32 %v400, %v611
        %v613 = vpop.f32.mrf.mxu0
        %614 = vmatprep.mubr.f32.mxu0 0.0
        %615 = vmatmul.mubr.f32.gmra.mxu0 %v470
        %v616 = vpop.f32.mrf.mxu0
        %v617 = vadd.f32 %v405, %v616
        %v618 = vpop.f32.mrf.mxu0
        %619 = vmatprep.mubr.f32.mxu0 0.0
        %620 = vmatmul.mubr.f32.gmra.mxu0 %v473
        %v621 = vpop.f32.mrf.mxu0
        %v622 = vadd.f32 %v410, %v621
        %v623 = vpop.f32.mrf.mxu0
        %624 = vmatprep.mubr.f32.mxu0 0.0
        %625 = vmatmul.mubr.f32.gmra.mxu0 %v476
        %v626 = vpop.f32.mrf.mxu0
        %v627 = vadd.f32 %v415, %v626
        %v628 = vpop.f32.mrf.mxu0
        %629 = vmatprep.mubr.f32.mxu0 0.0
        %630 = vmatmul.mubr.f32.gmra.mxu0 %v479
        %v631 = vpop.f32.mrf.mxu0
        %v632 = vadd.f32 %v420, %v631
        %v633 = vpop.f32.mrf.mxu0
        %634 = vmatprep.mubr.f32.mxu0 0.0
        %635 = vmatmul.mubr.f32.gmra.mxu0 %v482
        %v636 = vpop.f32.mrf.mxu0
        %v637 = vadd.f32 %v425, %v636
        %v638 = vpop.f32.mrf.mxu0
        %639 = vmatprep.mubr.f32.mxu0 0.0
        %640 = vmatmul.mubr.f32.gmra.mxu0 %v485
        %v641 = vpop.f32.mrf.mxu0
        %v642 = vadd.f32 %v430, %v641
        %v643 = vpop.f32.mrf.mxu0
        %644 = vdwg.mxu0
        %v645 = vld [vmem:[%s179 + $0x2] sm:$0xff]
        %v646 = vld [vmem:[%s179 + $0xa] sm:$0xff]
        %v647 = vld [vmem:[%s179 + $0x12] sm:$0xff]
        %v648 = vld [vmem:[%s179 + $0x1a] sm:$0xff]
        %v649 = vld [vmem:[%s179 + $0x22] sm:$0xff]
        %v650 = vld [vmem:[%s179 + $0x2a] sm:$0xff]
        %v651 = vld [vmem:[%s179 + $0x32] sm:$0xff]
        %v652 = vld [vmem:[%s179 + $0x3a] sm:$0xff]
        %v653 = vld [vmem:[%s179 + $0x42] sm:$0xff]
        %v654 = vld [vmem:[%s179 + $0x4a] sm:$0xff]
        %v655 = vld [vmem:[%s179 + $0x52] sm:$0xff]
        %v656 = vld [vmem:[%s179 + $0x5a] sm:$0xff]
        %v657 = vld [vmem:[%s179 + $0x62] sm:$0xff]
        %v658 = vld [vmem:[%s179 + $0x6a] sm:$0xff]
        %v659 = vld [vmem:[%s179 + $0x72] sm:$0xff]
        %v660 = vld [vmem:[%s179 + $0x7a] sm:$0xff]
        %v661 = vld [vmem:[%s179 + $0x82] sm:$0xff]
        %v662 = vld [vmem:[%s179 + $0x8a] sm:$0xff]
        %s663 = scalar_lea.vmem %s1, 8
        %v664 = vld [vmem:[%s663] sm:$0xf]
        %v666 = vsel %vm219, %v645, 0
        %v669 = vsel %vm219, %v646, 0
        %v672 = vsel %vm219, %v647, 0
        %v675 = vsel %vm219, %v648, 0
        %v678 = vsel %vm219, %v649, 0
        %v681 = vsel %vm219, %v650, 0
        %v684 = vsel %vm219, %v651, 0
        %v687 = vsel %vm219, %v652, 0
        %v690 = vsel %vm219, %v653, 0
        %v693 = vsel %vm219, %v654, 0
        %v696 = vsel %vm219, %v655, 0
        %v699 = vsel %vm219, %v656, 0
        %v702 = vsel %vm219, %v657, 0
        %v705 = vsel %vm219, %v658, 0
        %v708 = vsel %vm219, %v659, 0
        %v711 = vsel %vm219, %v660, 0
        %v714 = vsel %vm219, %v661, 0
        %v717 = vsel %vm219, %v662, 0
        %v720 = vsel %vm274, %v664, 0
        %722 = vmatprep.subr.mxu0 0.0
        %723 = vmatpush1.msra.mxu0 0.0
        %724 = vmatprep.subr.mxu0 0.0
        %725 = vmatpush1.msra.mxu0 0.0
        %726 = vmatprep.subr.mxu0 0.0
        %727 = vmatpush1.msra.mxu0 0.0
        %728 = vmatprep.subr.mxu0 0.0
        %729 = vmatpush1.msra.mxu0 0.0
        %730 = vmatprep.subr.mxu0 0.0
        %731 = vmatpush1.msra.mxu0 0.0
        %732 = vmatprep.subr.mxu0 0.0
        %733 = vmatpush1.msra.mxu0 0.0
        %734 = vmatprep.subr.mxu0 0.0
        %735 = vmatpush1.msra.mxu0 0.0
        %736 = vmatprep.subr.mxu0 0.0
        %737 = vmatpush1.msra.mxu0 0.0
        %738 = vmatprep.subr.mxu0 0.0
        %739 = vmatpush1.msra.mxu0 0.0
        %740 = vmatprep.subr.mxu0 0.0
        %741 = vmatpush1.msra.mxu0 0.0
        %742 = vmatprep.subr.mxu0 0.0
        %743 = vmatpush1.msra.mxu0 0.0
        %744 = vmatprep.subr.mxu0 0.0
        %745 = vmatpush1.msra.mxu0 0.0
        %746 = vmatprep.subr.mxu0 0.0
        %747 = vmatpush1.msra.mxu0 0.0
        %748 = vmatprep.subr.mxu0 0.0
        %749 = vmatpush1.msra.mxu0 0.0
        %750 = vmatprep.subr.mxu0 0.0
        %751 = vmatpush1.msra.mxu0 0.0
        %752 = vmatprep.subr.mxu0 0.0
        %753 = vmatpush1.msra.mxu0 %v720
        %754 = vmatprep.subr.mxu0 0.0
        %755 = vmatpush2.msra.mxu0 0.0
        %756 = vmatprep.subr.mxu0 0.0
        %757 = vmatpush2.msra.mxu0 0.0
        %758 = vmatprep.subr.mxu0 0.0
        %759 = vmatpush2.msra.mxu0 0.0
        %760 = vmatprep.subr.mxu0 0.0
        %761 = vmatpush2.msra.mxu0 0.0
        %762 = vmatprep.subr.mxu0 0.0
        %763 = vmatpush2.msra.mxu0 0.0
        %764 = vmatprep.subr.mxu0 0.0
        %765 = vmatpush2.msra.mxu0 0.0
        %766 = vmatprep.subr.mxu0 0.0
        %767 = vmatpush2.msra.mxu0 0.0
        %768 = vmatprep.subr.mxu0 0.0
        %769 = vmatpush2.msra.mxu0 0.0
        %770 = vmatprep.subr.mxu0 0.0
        %771 = vmatpush2.msra.mxu0 0.0
        %772 = vmatprep.subr.mxu0 0.0
        %773 = vmatpush2.msra.mxu0 0.0
        %774 = vmatprep.subr.mxu0 0.0
        %775 = vmatpush2.msra.mxu0 0.0
        %776 = vmatprep.subr.mxu0 0.0
        %777 = vmatpush2.msra.mxu0 0.0
        %778 = vmatprep.subr.mxu0 0.0
        %779 = vmatpush2.msra.mxu0 0.0
        %780 = vmatprep.subr.mxu0 0.0
        %781 = vmatpush2.msra.mxu0 0.0
        %782 = vmatprep.subr.mxu0 0.0
        %783 = vmatpush2.msra.mxu0 0.0
        %784 = vmatprep.subr.mxu0 0.0
        %785 = vmatpush2.msra.mxu0 0.0
        %786 = vmatprep.mubr.f32.mxu0 0.0
        %787 = vmatmul.mubr.f32.gmra.mxu0 %v666
        %v788 = vpop.f32.mrf.mxu0
        %v789 = vadd.f32 0.0, %v788
        %v790 = vpop.f32.mrf.mxu0
        %791 = vmatprep.mubr.f32.mxu0 0.0
        %792 = vmatmul.mubr.f32.gmra.mxu0 %v669
        %v793 = vpop.f32.mrf.mxu0
        %v794 = vadd.f32 0.0, %v793
        %v795 = vpop.f32.mrf.mxu0
        %796 = vmatprep.mubr.f32.mxu0 0.0
        %797 = vmatmul.mubr.f32.gmra.mxu0 %v672
        %v798 = vpop.f32.mrf.mxu0
        %v799 = vadd.f32 0.0, %v798
        %v800 = vpop.f32.mrf.mxu0
        %801 = vmatprep.mubr.f32.mxu0 0.0
        %802 = vmatmul.mubr.f32.gmra.mxu0 %v675
        %v803 = vpop.f32.mrf.mxu0
        %v804 = vadd.f32 0.0, %v803
        %v805 = vpop.f32.mrf.mxu0
        %806 = vmatprep.mubr.f32.mxu0 0.0
        %807 = vmatmul.mubr.f32.gmra.mxu0 %v678
        %v808 = vpop.f32.mrf.mxu0
        %v809 = vadd.f32 0.0, %v808
        %v810 = vpop.f32.mrf.mxu0
        %811 = vmatprep.mubr.f32.mxu0 0.0
        %812 = vmatmul.mubr.f32.gmra.mxu0 %v681
        %v813 = vpop.f32.mrf.mxu0
        %v814 = vadd.f32 0.0, %v813
        %v815 = vpop.f32.mrf.mxu0
        %816 = vmatprep.mubr.f32.mxu0 0.0
        %817 = vmatmul.mubr.f32.gmra.mxu0 %v684
        %v818 = vpop.f32.mrf.mxu0
        %v819 = vadd.f32 0.0, %v818
        %v820 = vpop.f32.mrf.mxu0
        %821 = vmatprep.mubr.f32.mxu0 0.0
        %822 = vmatmul.mubr.f32.gmra.mxu0 %v687
        %v823 = vpop.f32.mrf.mxu0
        %v824 = vadd.f32 0.0, %v823
        %v825 = vpop.f32.mrf.mxu0
        %826 = vmatprep.mubr.f32.mxu0 0.0
        %827 = vmatmul.mubr.f32.gmra.mxu0 %v690
        %v828 = vpop.f32.mrf.mxu0
        %v829 = vadd.f32 0.0, %v828
        %v830 = vpop.f32.mrf.mxu0
        %831 = vmatprep.mubr.f32.mxu0 0.0
        %832 = vmatmul.mubr.f32.gmra.mxu0 %v693
        %v833 = vpop.f32.mrf.mxu0
        %v834 = vadd.f32 0.0, %v833
        %v835 = vpop.f32.mrf.mxu0
        %836 = vmatprep.mubr.f32.mxu0 0.0
        %837 = vmatmul.mubr.f32.gmra.mxu0 %v696
        %v838 = vpop.f32.mrf.mxu0
        %v839 = vadd.f32 0.0, %v838
        %v840 = vpop.f32.mrf.mxu0
        %841 = vmatprep.mubr.f32.mxu0 0.0
        %842 = vmatmul.mubr.f32.gmra.mxu0 %v699
        %v843 = vpop.f32.mrf.mxu0
        %v844 = vadd.f32 0.0, %v843
        %v845 = vpop.f32.mrf.mxu0
        %846 = vmatprep.mubr.f32.mxu0 0.0
        %847 = vmatmul.mubr.f32.gmra.mxu0 %v702
        %v848 = vpop.f32.mrf.mxu0
        %v849 = vadd.f32 0.0, %v848
        %v850 = vpop.f32.mrf.mxu0
        %851 = vmatprep.mubr.f32.mxu0 0.0
        %852 = vmatmul.mubr.f32.gmra.mxu0 %v705
        %v853 = vpop.f32.mrf.mxu0
        %v854 = vadd.f32 0.0, %v853
        %v855 = vpop.f32.mrf.mxu0
        %856 = vmatprep.mubr.f32.mxu0 0.0
        %857 = vmatmul.mubr.f32.gmra.mxu0 %v708
        %v858 = vpop.f32.mrf.mxu0
        %v859 = vadd.f32 0.0, %v858
        %v860 = vpop.f32.mrf.mxu0
        %861 = vmatprep.mubr.f32.mxu0 0.0
        %862 = vmatmul.mubr.f32.gmra.mxu0 %v711
        %v863 = vpop.f32.mrf.mxu0
        %v864 = vadd.f32 0.0, %v863
        %v865 = vpop.f32.mrf.mxu0
        %866 = vmatprep.mubr.f32.mxu0 0.0
        %867 = vmatmul.mubr.f32.gmra.mxu0 %v714
        %v868 = vpop.f32.mrf.mxu0
        %v869 = vadd.f32 0.0, %v868
        %v870 = vpop.f32.mrf.mxu0
        %871 = vmatprep.mubr.f32.mxu0 0.0
        %872 = vmatmul.mubr.f32.gmra.mxu0 %v717
        %v873 = vpop.f32.mrf.mxu0
        %v874 = vadd.f32 0.0, %v873
        %v875 = vpop.f32.mrf.mxu0
        %876 = vdwg.mxu0
        %v877 = vadd.f32 %v557, %v789
        %v878 = vadd.f32 %v562, %v794
        %v879 = vadd.f32 %v567, %v799
        %v880 = vadd.f32 %v572, %v804
        %v881 = vadd.f32 %v577, %v809
        %v882 = vadd.f32 %v582, %v814
        %v883 = vadd.f32 %v587, %v819
        %v884 = vadd.f32 %v592, %v824
        %v885 = vadd.f32 %v597, %v829
        %v886 = vadd.f32 %v602, %v834
        %v887 = vadd.f32 %v607, %v839
        %v888 = vadd.f32 %v612, %v844
        %v889 = vadd.f32 %v617, %v849
        %v890 = vadd.f32 %v622, %v854
        %v891 = vadd.f32 %v627, %v859
        %v892 = vadd.f32 %v632, %v864
        %v893 = vadd.f32 %v637, %v869
        %v894 = vadd.f32 %v642, %v874
        %v895 = vld [vmem:[%s179 + $0x12] sm:$0xff]
        %v896 = vld [vmem:[%s179 + $0x1a] sm:$0xff]
        %v897 = vld [vmem:[%s179 + $0x22] sm:$0xff]
        %v898 = vld [vmem:[%s179 + $0x2a] sm:$0xff]
        %v899 = vld [vmem:[%s179 + $0x32] sm:$0xff]
        %v900 = vld [vmem:[%s179 + $0x3a] sm:$0xff]
        %v901 = vld [vmem:[%s179 + $0x42] sm:$0xff]
        %v902 = vld [vmem:[%s179 + $0x4a] sm:$0xff]
        %v903 = vld [vmem:[%s179 + $0x52] sm:$0xff]
        %v904 = vld [vmem:[%s179 + $0x5a] sm:$0xff]
        %v905 = vld [vmem:[%s179 + $0x62] sm:$0xff]
        %v906 = vld [vmem:[%s179 + $0x6a] sm:$0xff]
        %v907 = vld [vmem:[%s179 + $0x72] sm:$0xff]
        %v908 = vld [vmem:[%s179 + $0x7a] sm:$0xff]
        %v909 = vld [vmem:[%s179 + $0x82] sm:$0xff]
        %v910 = vld [vmem:[%s179 + $0x8a] sm:$0xff]
        %v911 = vld [vmem:[%s179 + $0x92] sm:$0xff]
        %v912 = vld [vmem:[%s179 + $0x9a] sm:$0xff]
        %s913 = scalar_lea.vmem %s1, 12
        %v914 = vld [vmem:[%s913] sm:$0xf]
        %v916 = vsel %vm219, %v895, 0
        %v919 = vsel %vm219, %v896, 0
        %v922 = vsel %vm219, %v897, 0
        %v925 = vsel %vm219, %v898, 0
        %v928 = vsel %vm219, %v899, 0
        %v931 = vsel %vm219, %v900, 0
        %v934 = vsel %vm219, %v901, 0
        %v937 = vsel %vm219, %v902, 0
        %v940 = vsel %vm219, %v903, 0
        %v943 = vsel %vm219, %v904, 0
        %v946 = vsel %vm219, %v905, 0
        %v949 = vsel %vm219, %v906, 0
        %v952 = vsel %vm219, %v907, 0
        %v955 = vsel %vm219, %v908, 0
        %v958 = vsel %vm219, %v909, 0
        %v961 = vsel %vm219, %v910, 0
        %v964 = vsel %vm219, %v911, 0
        %v967 = vsel %vm219, %v912, 0
        %v970 = vsel %vm274, %v914, 0
        %972 = vmatprep.subr.mxu0 0.0
        %973 = vmatpush1.msra.mxu0 0.0
        %974 = vmatprep.subr.mxu0 0.0
        %975 = vmatpush1.msra.mxu0 0.0
        %976 = vmatprep.subr.mxu0 0.0
        %977 = vmatpush1.msra.mxu0 0.0
        %978 = vmatprep.subr.mxu0 0.0
        %979 = vmatpush1.msra.mxu0 0.0
        %980 = vmatprep.subr.mxu0 0.0
        %981 = vmatpush1.msra.mxu0 0.0
        %982 = vmatprep.subr.mxu0 0.0
        %983 = vmatpush1.msra.mxu0 0.0
        %984 = vmatprep.subr.mxu0 0.0
        %985 = vmatpush1.msra.mxu0 0.0
        %986 = vmatprep.subr.mxu0 0.0
        %987 = vmatpush1.msra.mxu0 0.0
        %988 = vmatprep.subr.mxu0 0.0
        %989 = vmatpush1.msra.mxu0 0.0
        %990 = vmatprep.subr.mxu0 0.0
        %991 = vmatpush1.msra.mxu0 0.0
        %992 = vmatprep.subr.mxu0 0.0
        %993 = vmatpush1.msra.mxu0 0.0
        %994 = vmatprep.subr.mxu0 0.0
        %995 = vmatpush1.msra.mxu0 0.0
        %996 = vmatprep.subr.mxu0 0.0
        %997 = vmatpush1.msra.mxu0 0.0
        %998 = vmatprep.subr.mxu0 0.0
        %999 = vmatpush1.msra.mxu0 0.0
        %1000 = vmatprep.subr.mxu0 0.0
        %1001 = vmatpush1.msra.mxu0 0.0
        %1002 = vmatprep.subr.mxu0 0.0
        %1003 = vmatpush1.msra.mxu0 %v970
        %1004 = vmatprep.subr.mxu0 0.0
        %1005 = vmatpush2.msra.mxu0 0.0
        %1006 = vmatprep.subr.mxu0 0.0
        %1007 = vmatpush2.msra.mxu0 0.0
        %1008 = vmatprep.subr.mxu0 0.0
        %1009 = vmatpush2.msra.mxu0 0.0
        %1010 = vmatprep.subr.mxu0 0.0
        %1011 = vmatpush2.msra.mxu0 0.0
        %1012 = vmatprep.subr.mxu0 0.0
        %1013 = vmatpush2.msra.mxu0 0.0
        %1014 = vmatprep.subr.mxu0 0.0
        %1015 = vmatpush2.msra.mxu0 0.0
        %1016 = vmatprep.subr.mxu0 0.0
        %1017 = vmatpush2.msra.mxu0 0.0
        %1018 = vmatprep.subr.mxu0 0.0
        %1019 = vmatpush2.msra.mxu0 0.0
        %1020 = vmatprep.subr.mxu0 0.0
        %1021 = vmatpush2.msra.mxu0 0.0
        %1022 = vmatprep.subr.mxu0 0.0
        %1023 = vmatpush2.msra.mxu0 0.0
        %1024 = vmatprep.subr.mxu0 0.0
        %1025 = vmatpush2.msra.mxu0 0.0
        %1026 = vmatprep.subr.mxu0 0.0
        %1027 = vmatpush2.msra.mxu0 0.0
        %1028 = vmatprep.subr.mxu0 0.0
        %1029 = vmatpush2.msra.mxu0 0.0
        %1030 = vmatprep.subr.mxu0 0.0
        %1031 = vmatpush2.msra.mxu0 0.0
        %1032 = vmatprep.subr.mxu0 0.0
        %1033 = vmatpush2.msra.mxu0 0.0
        %1034 = vmatprep.subr.mxu0 0.0
        %1035 = vmatpush2.msra.mxu0 0.0
        %1036 = vmatprep.mubr.f32.mxu0 0.0
        %1037 = vmatmul.mubr.f32.gmra.mxu0 %v916
        %v1038 = vpop.f32.mrf.mxu0
        %v1039 = vadd.f32 0.0, %v1038
        %v1040 = vpop.f32.mrf.mxu0
        %1041 = vmatprep.mubr.f32.mxu0 0.0
        %1042 = vmatmul.mubr.f32.gmra.mxu0 %v919
        %v1043 = vpop.f32.mrf.mxu0
        %v1044 = vadd.f32 0.0, %v1043
        %v1045 = vpop.f32.mrf.mxu0
        %1046 = vmatprep.mubr.f32.mxu0 0.0
        %1047 = vmatmul.mubr.f32.gmra.mxu0 %v922
        %v1048 = vpop.f32.mrf.mxu0
        %v1049 = vadd.f32 0.0, %v1048
        %v1050 = vpop.f32.mrf.mxu0
        %1051 = vmatprep.mubr.f32.mxu0 0.0
        %1052 = vmatmul.mubr.f32.gmra.mxu0 %v925
        %v1053 = vpop.f32.mrf.mxu0
        %v1054 = vadd.f32 0.0, %v1053
        %v1055 = vpop.f32.mrf.mxu0
        %1056 = vmatprep.mubr.f32.mxu0 0.0
        %1057 = vmatmul.mubr.f32.gmra.mxu0 %v928
        %v1058 = vpop.f32.mrf.mxu0
        %v1059 = vadd.f32 0.0, %v1058
        %v1060 = vpop.f32.mrf.mxu0
        %1061 = vmatprep.mubr.f32.mxu0 0.0
        %1062 = vmatmul.mubr.f32.gmra.mxu0 %v931
        %v1063 = vpop.f32.mrf.mxu0
        %v1064 = vadd.f32 0.0, %v1063
        %v1065 = vpop.f32.mrf.mxu0
        %1066 = vmatprep.mubr.f32.mxu0 0.0
        %1067 = vmatmul.mubr.f32.gmra.mxu0 %v934
        %v1068 = vpop.f32.mrf.mxu0
        %v1069 = vadd.f32 0.0, %v1068
        %v1070 = vpop.f32.mrf.mxu0
        %1071 = vmatprep.mubr.f32.mxu0 0.0
        %1072 = vmatmul.mubr.f32.gmra.mxu0 %v937
        %v1073 = vpop.f32.mrf.mxu0
        %v1074 = vadd.f32 0.0, %v1073
        %v1075 = vpop.f32.mrf.mxu0
        %1076 = vmatprep.mubr.f32.mxu0 0.0
        %1077 = vmatmul.mubr.f32.gmra.mxu0 %v940
        %v1078 = vpop.f32.mrf.mxu0
        %v1079 = vadd.f32 0.0, %v1078
        %v1080 = vpop.f32.mrf.mxu0
        %1081 = vmatprep.mubr.f32.mxu0 0.0
        %1082 = vmatmul.mubr.f32.gmra.mxu0 %v943
        %v1083 = vpop.f32.mrf.mxu0
        %v1084 = vadd.f32 0.0, %v1083
        %v1085 = vpop.f32.mrf.mxu0
        %1086 = vmatprep.mubr.f32.mxu0 0.0
        %1087 = vmatmul.mubr.f32.gmra.mxu0 %v946
        %v1088 = vpop.f32.mrf.mxu0
        %v1089 = vadd.f32 0.0, %v1088
        %v1090 = vpop.f32.mrf.mxu0
        %1091 = vmatprep.mubr.f32.mxu0 0.0
        %1092 = vmatmul.mubr.f32.gmra.mxu0 %v949
        %v1093 = vpop.f32.mrf.mxu0
        %v1094 = vadd.f32 0.0, %v1093
        %v1095 = vpop.f32.mrf.mxu0
        %1096 = vmatprep.mubr.f32.mxu0 0.0
        %1097 = vmatmul.mubr.f32.gmra.mxu0 %v952
        %v1098 = vpop.f32.mrf.mxu0
        %v1099 = vadd.f32 0.0, %v1098
        %v1100 = vpop.f32.mrf.mxu0
        %1101 = vmatprep.mubr.f32.mxu0 0.0
        %1102 = vmatmul.mubr.f32.gmra.mxu0 %v955
        %v1103 = vpop.f32.mrf.mxu0
        %v1104 = vadd.f32 0.0, %v1103
        %v1105 = vpop.f32.mrf.mxu0
        %1106 = vmatprep.mubr.f32.mxu0 0.0
        %1107 = vmatmul.mubr.f32.gmra.mxu0 %v958
        %v1108 = vpop.f32.mrf.mxu0
        %v1109 = vadd.f32 0.0, %v1108
        %v1110 = vpop.f32.mrf.mxu0
        %1111 = vmatprep.mubr.f32.mxu0 0.0
        %1112 = vmatmul.mubr.f32.gmra.mxu0 %v961
        %v1113 = vpop.f32.mrf.mxu0
        %v1114 = vadd.f32 0.0, %v1113
        %v1115 = vpop.f32.mrf.mxu0
        %1116 = vmatprep.mubr.f32.mxu0 0.0
        %1117 = vmatmul.mubr.f32.gmra.mxu0 %v964
        %v1118 = vpop.f32.mrf.mxu0
        %v1119 = vadd.f32 0.0, %v1118
        %v1120 = vpop.f32.mrf.mxu0
        %1121 = vmatprep.mubr.f32.mxu0 0.0
        %1122 = vmatmul.mubr.f32.gmra.mxu0 %v967
        %v1123 = vpop.f32.mrf.mxu0
        %v1124 = vadd.f32 0.0, %v1123
        %v1125 = vpop.f32.mrf.mxu0
        %1126 = vdwg.mxu0
        %v1127 = vadd.f32 %v877, %v1039
        %v1128 = vadd.f32 %v878, %v1044
        %v1129 = vadd.f32 %v879, %v1049
        %v1130 = vadd.f32 %v880, %v1054
        %v1131 = vadd.f32 %v881, %v1059
        %v1132 = vadd.f32 %v882, %v1064
        %v1133 = vadd.f32 %v883, %v1069
        %v1134 = vadd.f32 %v884, %v1074
        %v1135 = vadd.f32 %v885, %v1079
        %v1136 = vadd.f32 %v886, %v1084
        %v1137 = vadd.f32 %v887, %v1089
        %v1138 = vadd.f32 %v888, %v1094
        %v1139 = vadd.f32 %v889, %v1099
        %v1140 = vadd.f32 %v890, %v1104
        %v1141 = vadd.f32 %v891, %v1109
        %v1142 = vadd.f32 %v892, %v1114
        %v1143 = vadd.f32 %v893, %v1119
        %v1144 = vadd.f32 %v894, %v1124
        %v1145 = vld [vmem:[%s179 + $0x13] sm:$0xff]
        %v1146 = vld [vmem:[%s179 + $0x1b] sm:$0xff]
        %v1147 = vld [vmem:[%s179 + $0x23] sm:$0xff]
        %v1148 = vld [vmem:[%s179 + $0x2b] sm:$0xff]
        %v1149 = vld [vmem:[%s179 + $0x33] sm:$0xff]
        %v1150 = vld [vmem:[%s179 + $0x3b] sm:$0xff]
        %v1151 = vld [vmem:[%s179 + $0x43] sm:$0xff]
        %v1152 = vld [vmem:[%s179 + $0x4b] sm:$0xff]
        %v1153 = vld [vmem:[%s179 + $0x53] sm:$0xff]
        %v1154 = vld [vmem:[%s179 + $0x5b] sm:$0xff]
        %v1155 = vld [vmem:[%s179 + $0x63] sm:$0xff]
        %v1156 = vld [vmem:[%s179 + $0x6b] sm:$0xff]
        %v1157 = vld [vmem:[%s179 + $0x73] sm:$0xff]
        %v1158 = vld [vmem:[%s179 + $0x7b] sm:$0xff]
        %v1159 = vld [vmem:[%s179 + $0x83] sm:$0xff]
        %v1160 = vld [vmem:[%s179 + $0x8b] sm:$0xff]
        %v1161 = vld [vmem:[%s179 + $0x93] sm:$0xff]
        %v1162 = vld [vmem:[%s179 + $0x9b] sm:$0xff]
        %s1163 = scalar_lea.vmem %s1, 16
        %v1164 = vld [vmem:[%s1163] sm:$0xf]
        %v1166 = vsel %vm219, %v1145, 0
        %v1169 = vsel %vm219, %v1146, 0
        %v1172 = vsel %vm219, %v1147, 0
        %v1175 = vsel %vm219, %v1148, 0
        %v1178 = vsel %vm219, %v1149, 0
        %v1181 = vsel %vm219, %v1150, 0
        %v1184 = vsel %vm219, %v1151, 0
        %v1187 = vsel %vm219, %v1152, 0
        %v1190 = vsel %vm219, %v1153, 0
        %v1193 = vsel %vm219, %v1154, 0
        %v1196 = vsel %vm219, %v1155, 0
        %v1199 = vsel %vm219, %v1156, 0
        %v1202 = vsel %vm219, %v1157, 0
        %v1205 = vsel %vm219, %v1158, 0
        %v1208 = vsel %vm219, %v1159, 0
        %v1211 = vsel %vm219, %v1160, 0
        %v1214 = vsel %vm219, %v1161, 0
        %v1217 = vsel %vm219, %v1162, 0
        %v1220 = vsel %vm274, %v1164, 0
        %1222 = vmatprep.subr.mxu0 0.0
        %1223 = vmatpush1.msra.mxu0 0.0
        %1224 = vmatprep.subr.mxu0 0.0
        %1225 = vmatpush1.msra.mxu0 0.0
        %1226 = vmatprep.subr.mxu0 0.0
        %1227 = vmatpush1.msra.mxu0 0.0
        %1228 = vmatprep.subr.mxu0 0.0
        %1229 = vmatpush1.msra.mxu0 0.0
        %1230 = vmatprep.subr.mxu0 0.0
        %1231 = vmatpush1.msra.mxu0 0.0
        %1232 = vmatprep.subr.mxu0 0.0
        %1233 = vmatpush1.msra.mxu0 0.0
        %1234 = vmatprep.subr.mxu0 0.0
        %1235 = vmatpush1.msra.mxu0 0.0
        %1236 = vmatprep.subr.mxu0 0.0
        %1237 = vmatpush1.msra.mxu0 0.0
        %1238 = vmatprep.subr.mxu0 0.0
        %1239 = vmatpush1.msra.mxu0 0.0
        %1240 = vmatprep.subr.mxu0 0.0
        %1241 = vmatpush1.msra.mxu0 0.0
        %1242 = vmatprep.subr.mxu0 0.0
        %1243 = vmatpush1.msra.mxu0 0.0
        %1244 = vmatprep.subr.mxu0 0.0
        %1245 = vmatpush1.msra.mxu0 0.0
        %1246 = vmatprep.subr.mxu0 0.0
        %1247 = vmatpush1.msra.mxu0 0.0
        %1248 = vmatprep.subr.mxu0 0.0
        %1249 = vmatpush1.msra.mxu0 0.0
        %1250 = vmatprep.subr.mxu0 0.0
        %1251 = vmatpush1.msra.mxu0 0.0
        %1252 = vmatprep.subr.mxu0 0.0
        %1253 = vmatpush1.msra.mxu0 %v1220
        %1254 = vmatprep.subr.mxu0 0.0
        %1255 = vmatpush2.msra.mxu0 0.0
        %1256 = vmatprep.subr.mxu0 0.0
        %1257 = vmatpush2.msra.mxu0 0.0
        %1258 = vmatprep.subr.mxu0 0.0
        %1259 = vmatpush2.msra.mxu0 0.0
        %1260 = vmatprep.subr.mxu0 0.0
        %1261 = vmatpush2.msra.mxu0 0.0
        %1262 = vmatprep.subr.mxu0 0.0
        %1263 = vmatpush2.msra.mxu0 0.0
        %1264 = vmatprep.subr.mxu0 0.0
        %1265 = vmatpush2.msra.mxu0 0.0
        %1266 = vmatprep.subr.mxu0 0.0
        %1267 = vmatpush2.msra.mxu0 0.0
        %1268 = vmatprep.subr.mxu0 0.0
        %1269 = vmatpush2.msra.mxu0 0.0
        %1270 = vmatprep.subr.mxu0 0.0
        %1271 = vmatpush2.msra.mxu0 0.0
        %1272 = vmatprep.subr.mxu0 0.0
        %1273 = vmatpush2.msra.mxu0 0.0
        %1274 = vmatprep.subr.mxu0 0.0
        %1275 = vmatpush2.msra.mxu0 0.0
        %1276 = vmatprep.subr.mxu0 0.0
        %1277 = vmatpush2.msra.mxu0 0.0
        %1278 = vmatprep.subr.mxu0 0.0
        %1279 = vmatpush2.msra.mxu0 0.0
        %1280 = vmatprep.subr.mxu0 0.0
        %1281 = vmatpush2.msra.mxu0 0.0
        %1282 = vmatprep.subr.mxu0 0.0
        %1283 = vmatpush2.msra.mxu0 0.0
        %1284 = vmatprep.subr.mxu0 0.0
        %1285 = vmatpush2.msra.mxu0 0.0
        %1286 = vmatprep.mubr.f32.mxu0 0.0
        %1287 = vmatmul.mubr.f32.gmra.mxu0 %v1166
        %v1288 = vpop.f32.mrf.mxu0
        %v1289 = vadd.f32 0.0, %v1288
        %v1290 = vpop.f32.mrf.mxu0
        %1291 = vmatprep.mubr.f32.mxu0 0.0
        %1292 = vmatmul.mubr.f32.gmra.mxu0 %v1169
        %v1293 = vpop.f32.mrf.mxu0
        %v1294 = vadd.f32 0.0, %v1293
        %v1295 = vpop.f32.mrf.mxu0
        %1296 = vmatprep.mubr.f32.mxu0 0.0
        %1297 = vmatmul.mubr.f32.gmra.mxu0 %v1172
        %v1298 = vpop.f32.mrf.mxu0
        %v1299 = vadd.f32 0.0, %v1298
        %v1300 = vpop.f32.mrf.mxu0
        %1301 = vmatprep.mubr.f32.mxu0 0.0
        %1302 = vmatmul.mubr.f32.gmra.mxu0 %v1175
        %v1303 = vpop.f32.mrf.mxu0
        %v1304 = vadd.f32 0.0, %v1303
        %v1305 = vpop.f32.mrf.mxu0
        %1306 = vmatprep.mubr.f32.mxu0 0.0
        %1307 = vmatmul.mubr.f32.gmra.mxu0 %v1178
        %v1308 = vpop.f32.mrf.mxu0
        %v1309 = vadd.f32 0.0, %v1308
        %v1310 = vpop.f32.mrf.mxu0
        %1311 = vmatprep.mubr.f32.mxu0 0.0
        %1312 = vmatmul.mubr.f32.gmra.mxu0 %v1181
        %v1313 = vpop.f32.mrf.mxu0
        %v1314 = vadd.f32 0.0, %v1313
        %v1315 = vpop.f32.mrf.mxu0
        %1316 = vmatprep.mubr.f32.mxu0 0.0
        %1317 = vmatmul.mubr.f32.gmra.mxu0 %v1184
        %v1318 = vpop.f32.mrf.mxu0
        %v1319 = vadd.f32 0.0, %v1318
        %v1320 = vpop.f32.mrf.mxu0
        %1321 = vmatprep.mubr.f32.mxu0 0.0
        %1322 = vmatmul.mubr.f32.gmra.mxu0 %v1187
        %v1323 = vpop.f32.mrf.mxu0
        %v1324 = vadd.f32 0.0, %v1323
        %v1325 = vpop.f32.mrf.mxu0
        %1326 = vmatprep.mubr.f32.mxu0 0.0
        %1327 = vmatmul.mubr.f32.gmra.mxu0 %v1190
        %v1328 = vpop.f32.mrf.mxu0
        %v1329 = vadd.f32 0.0, %v1328
        %v1330 = vpop.f32.mrf.mxu0
        %1331 = vmatprep.mubr.f32.mxu0 0.0
        %1332 = vmatmul.mubr.f32.gmra.mxu0 %v1193
        %v1333 = vpop.f32.mrf.mxu0
        %v1334 = vadd.f32 0.0, %v1333
        %v1335 = vpop.f32.mrf.mxu0
        %1336 = vmatprep.mubr.f32.mxu0 0.0
        %1337 = vmatmul.mubr.f32.gmra.mxu0 %v1196
        %v1338 = vpop.f32.mrf.mxu0
        %v1339 = vadd.f32 0.0, %v1338
        %v1340 = vpop.f32.mrf.mxu0
        %1341 = vmatprep.mubr.f32.mxu0 0.0
        %1342 = vmatmul.mubr.f32.gmra.mxu0 %v1199
        %v1343 = vpop.f32.mrf.mxu0
        %v1344 = vadd.f32 0.0, %v1343
        %v1345 = vpop.f32.mrf.mxu0
        %1346 = vmatprep.mubr.f32.mxu0 0.0
        %1347 = vmatmul.mubr.f32.gmra.mxu0 %v1202
        %v1348 = vpop.f32.mrf.mxu0
        %v1349 = vadd.f32 0.0, %v1348
        %v1350 = vpop.f32.mrf.mxu0
        %1351 = vmatprep.mubr.f32.mxu0 0.0
        %1352 = vmatmul.mubr.f32.gmra.mxu0 %v1205
        %v1353 = vpop.f32.mrf.mxu0
        %v1354 = vadd.f32 0.0, %v1353
        %v1355 = vpop.f32.mrf.mxu0
        %1356 = vmatprep.mubr.f32.mxu0 0.0
        %1357 = vmatmul.mubr.f32.gmra.mxu0 %v1208
        %v1358 = vpop.f32.mrf.mxu0
        %v1359 = vadd.f32 0.0, %v1358
        %v1360 = vpop.f32.mrf.mxu0
        %1361 = vmatprep.mubr.f32.mxu0 0.0
        %1362 = vmatmul.mubr.f32.gmra.mxu0 %v1211
        %v1363 = vpop.f32.mrf.mxu0
        %v1364 = vadd.f32 0.0, %v1363
        %v1365 = vpop.f32.mrf.mxu0
        %1366 = vmatprep.mubr.f32.mxu0 0.0
        %1367 = vmatmul.mubr.f32.gmra.mxu0 %v1214
        %v1368 = vpop.f32.mrf.mxu0
        %v1369 = vadd.f32 0.0, %v1368
        %v1370 = vpop.f32.mrf.mxu0
        %1371 = vmatprep.mubr.f32.mxu0 0.0
        %1372 = vmatmul.mubr.f32.gmra.mxu0 %v1217
        %v1373 = vpop.f32.mrf.mxu0
        %v1374 = vadd.f32 0.0, %v1373
        %v1375 = vpop.f32.mrf.mxu0
        %1376 = vdwg.mxu0
        %v1377 = vadd.f32 %v1127, %v1289
        %v1378 = vadd.f32 %v1128, %v1294
        %v1379 = vadd.f32 %v1129, %v1299
        %v1380 = vadd.f32 %v1130, %v1304
        %v1381 = vadd.f32 %v1131, %v1309
        %v1382 = vadd.f32 %v1132, %v1314
        %v1383 = vadd.f32 %v1133, %v1319
        %v1384 = vadd.f32 %v1134, %v1324
        %v1385 = vadd.f32 %v1135, %v1329
        %v1386 = vadd.f32 %v1136, %v1334
        %v1387 = vadd.f32 %v1137, %v1339
        %v1388 = vadd.f32 %v1138, %v1344
        %v1389 = vadd.f32 %v1139, %v1349
        %v1390 = vadd.f32 %v1140, %v1354
        %v1391 = vadd.f32 %v1141, %v1359
        %v1392 = vadd.f32 %v1142, %v1364
        %v1393 = vadd.f32 %v1143, %v1369
        %v1394 = vadd.f32 %v1144, %v1374
        %v1395 = vld [vmem:[%s179 + $0x14] sm:$0xff]
        %v1396 = vld [vmem:[%s179 + $0x1c] sm:$0xff]
        %v1397 = vld [vmem:[%s179 + $0x24] sm:$0xff]
        %v1398 = vld [vmem:[%s179 + $0x2c] sm:$0xff]
        %v1399 = vld [vmem:[%s179 + $0x34] sm:$0xff]
        %v1400 = vld [vmem:[%s179 + $0x3c] sm:$0xff]
        %v1401 = vld [vmem:[%s179 + $0x44] sm:$0xff]
        %v1402 = vld [vmem:[%s179 + $0x4c] sm:$0xff]
        %v1403 = vld [vmem:[%s179 + $0x54] sm:$0xff]
        %v1404 = vld [vmem:[%s179 + $0x5c] sm:$0xff]
        %v1405 = vld [vmem:[%s179 + $0x64] sm:$0xff]
        %v1406 = vld [vmem:[%s179 + $0x6c] sm:$0xff]
        %v1407 = vld [vmem:[%s179 + $0x74] sm:$0xff]
        %v1408 = vld [vmem:[%s179 + $0x7c] sm:$0xff]
        %v1409 = vld [vmem:[%s179 + $0x84] sm:$0xff]
        %v1410 = vld [vmem:[%s179 + $0x8c] sm:$0xff]
        %v1411 = vld [vmem:[%s179 + $0x94] sm:$0xff]
        %v1412 = vld [vmem:[%s179 + $0x9c] sm:$0xff]
        %s1413 = scalar_lea.vmem %s1, 20
        %v1414 = vld [vmem:[%s1413] sm:$0xf]
        %v1416 = vsel %vm219, %v1395, 0
        %v1419 = vsel %vm219, %v1396, 0
        %v1422 = vsel %vm219, %v1397, 0
        %v1425 = vsel %vm219, %v1398, 0
        %v1428 = vsel %vm219, %v1399, 0
        %v1431 = vsel %vm219, %v1400, 0
        %v1434 = vsel %vm219, %v1401, 0
        %v1437 = vsel %vm219, %v1402, 0
        %v1440 = vsel %vm219, %v1403, 0
        %v1443 = vsel %vm219, %v1404, 0
        %v1446 = vsel %vm219, %v1405, 0
        %v1449 = vsel %vm219, %v1406, 0
        %v1452 = vsel %vm219, %v1407, 0
        %v1455 = vsel %vm219, %v1408, 0
        %v1458 = vsel %vm219, %v1409, 0
        %v1461 = vsel %vm219, %v1410, 0
        %v1464 = vsel %vm219, %v1411, 0
        %v1467 = vsel %vm219, %v1412, 0
        %v1470 = vsel %vm274, %v1414, 0
        %1472 = vmatprep.subr.mxu0 0.0
        %1473 = vmatpush1.msra.mxu0 0.0
        %1474 = vmatprep.subr.mxu0 0.0
        %1475 = vmatpush1.msra.mxu0 0.0
        %1476 = vmatprep.subr.mxu0 0.0
        %1477 = vmatpush1.msra.mxu0 0.0
        %1478 = vmatprep.subr.mxu0 0.0
        %1479 = vmatpush1.msra.mxu0 0.0
        %1480 = vmatprep.subr.mxu0 0.0
        %1481 = vmatpush1.msra.mxu0 0.0
        %1482 = vmatprep.subr.mxu0 0.0
        %1483 = vmatpush1.msra.mxu0 0.0
        %1484 = vmatprep.subr.mxu0 0.0
        %1485 = vmatpush1.msra.mxu0 0.0
        %1486 = vmatprep.subr.mxu0 0.0
        %1487 = vmatpush1.msra.mxu0 0.0
        %1488 = vmatprep.subr.mxu0 0.0
        %1489 = vmatpush1.msra.mxu0 0.0
        %1490 = vmatprep.subr.mxu0 0.0
        %1491 = vmatpush1.msra.mxu0 0.0
        %1492 = vmatprep.subr.mxu0 0.0
        %1493 = vmatpush1.msra.mxu0 0.0
        %1494 = vmatprep.subr.mxu0 0.0
        %1495 = vmatpush1.msra.mxu0 0.0
        %1496 = vmatprep.subr.mxu0 0.0
        %1497 = vmatpush1.msra.mxu0 0.0
        %1498 = vmatprep.subr.mxu0 0.0
        %1499 = vmatpush1.msra.mxu0 0.0
        %1500 = vmatprep.subr.mxu0 0.0
        %1501 = vmatpush1.msra.mxu0 0.0
        %1502 = vmatprep.subr.mxu0 0.0
        %1503 = vmatpush1.msra.mxu0 %v1470
        %1504 = vmatprep.subr.mxu0 0.0
        %1505 = vmatpush2.msra.mxu0 0.0
        %1506 = vmatprep.subr.mxu0 0.0
        %1507 = vmatpush2.msra.mxu0 0.0
        %1508 = vmatprep.subr.mxu0 0.0
        %1509 = vmatpush2.msra.mxu0 0.0
        %1510 = vmatprep.subr.mxu0 0.0
        %1511 = vmatpush2.msra.mxu0 0.0
        %1512 = vmatprep.subr.mxu0 0.0
        %1513 = vmatpush2.msra.mxu0 0.0
        %1514 = vmatprep.subr.mxu0 0.0
        %1515 = vmatpush2.msra.mxu0 0.0
        %1516 = vmatprep.subr.mxu0 0.0
        %1517 = vmatpush2.msra.mxu0 0.0
        %1518 = vmatprep.subr.mxu0 0.0
        %1519 = vmatpush2.msra.mxu0 0.0
        %1520 = vmatprep.subr.mxu0 0.0
        %1521 = vmatpush2.msra.mxu0 0.0
        %1522 = vmatprep.subr.mxu0 0.0
        %1523 = vmatpush2.msra.mxu0 0.0
        %1524 = vmatprep.subr.mxu0 0.0
        %1525 = vmatpush2.msra.mxu0 0.0
        %1526 = vmatprep.subr.mxu0 0.0
        %1527 = vmatpush2.msra.mxu0 0.0
        %1528 = vmatprep.subr.mxu0 0.0
        %1529 = vmatpush2.msra.mxu0 0.0
        %1530 = vmatprep.subr.mxu0 0.0
        %1531 = vmatpush2.msra.mxu0 0.0
        %1532 = vmatprep.subr.mxu0 0.0
        %1533 = vmatpush2.msra.mxu0 0.0
        %1534 = vmatprep.subr.mxu0 0.0
        %1535 = vmatpush2.msra.mxu0 0.0
        %1536 = vmatprep.mubr.f32.mxu0 0.0
        %1537 = vmatmul.mubr.f32.gmra.mxu0 %v1416
        %v1538 = vpop.f32.mrf.mxu0
        %v1539 = vadd.f32 0.0, %v1538
        %v1540 = vpop.f32.mrf.mxu0
        %1541 = vmatprep.mubr.f32.mxu0 0.0
        %1542 = vmatmul.mubr.f32.gmra.mxu0 %v1419
        %v1543 = vpop.f32.mrf.mxu0
        %v1544 = vadd.f32 0.0, %v1543
        %v1545 = vpop.f32.mrf.mxu0
        %1546 = vmatprep.mubr.f32.mxu0 0.0
        %1547 = vmatmul.mubr.f32.gmra.mxu0 %v1422
        %v1548 = vpop.f32.mrf.mxu0
        %v1549 = vadd.f32 0.0, %v1548
        %v1550 = vpop.f32.mrf.mxu0
        %1551 = vmatprep.mubr.f32.mxu0 0.0
        %1552 = vmatmul.mubr.f32.gmra.mxu0 %v1425
        %v1553 = vpop.f32.mrf.mxu0
        %v1554 = vadd.f32 0.0, %v1553
        %v1555 = vpop.f32.mrf.mxu0
        %1556 = vmatprep.mubr.f32.mxu0 0.0
        %1557 = vmatmul.mubr.f32.gmra.mxu0 %v1428
        %v1558 = vpop.f32.mrf.mxu0
        %v1559 = vadd.f32 0.0, %v1558
        %v1560 = vpop.f32.mrf.mxu0
        %1561 = vmatprep.mubr.f32.mxu0 0.0
        %1562 = vmatmul.mubr.f32.gmra.mxu0 %v1431
        %v1563 = vpop.f32.mrf.mxu0
        %v1564 = vadd.f32 0.0, %v1563
        %v1565 = vpop.f32.mrf.mxu0
        %1566 = vmatprep.mubr.f32.mxu0 0.0
        %1567 = vmatmul.mubr.f32.gmra.mxu0 %v1434
        %v1568 = vpop.f32.mrf.mxu0
        %v1569 = vadd.f32 0.0, %v1568
        %v1570 = vpop.f32.mrf.mxu0
        %1571 = vmatprep.mubr.f32.mxu0 0.0
        %1572 = vmatmul.mubr.f32.gmra.mxu0 %v1437
        %v1573 = vpop.f32.mrf.mxu0
        %v1574 = vadd.f32 0.0, %v1573
        %v1575 = vpop.f32.mrf.mxu0
        %1576 = vmatprep.mubr.f32.mxu0 0.0
        %1577 = vmatmul.mubr.f32.gmra.mxu0 %v1440
        %v1578 = vpop.f32.mrf.mxu0
        %v1579 = vadd.f32 0.0, %v1578
        %v1580 = vpop.f32.mrf.mxu0
        %1581 = vmatprep.mubr.f32.mxu0 0.0
        %1582 = vmatmul.mubr.f32.gmra.mxu0 %v1443
        %v1583 = vpop.f32.mrf.mxu0
        %v1584 = vadd.f32 0.0, %v1583
        %v1585 = vpop.f32.mrf.mxu0
        %1586 = vmatprep.mubr.f32.mxu0 0.0
        %1587 = vmatmul.mubr.f32.gmra.mxu0 %v1446
        %v1588 = vpop.f32.mrf.mxu0
        %v1589 = vadd.f32 0.0, %v1588
        %v1590 = vpop.f32.mrf.mxu0
        %1591 = vmatprep.mubr.f32.mxu0 0.0
        %1592 = vmatmul.mubr.f32.gmra.mxu0 %v1449
        %v1593 = vpop.f32.mrf.mxu0
        %v1594 = vadd.f32 0.0, %v1593
        %v1595 = vpop.f32.mrf.mxu0
        %1596 = vmatprep.mubr.f32.mxu0 0.0
        %1597 = vmatmul.mubr.f32.gmra.mxu0 %v1452
        %v1598 = vpop.f32.mrf.mxu0
        %v1599 = vadd.f32 0.0, %v1598
        %v1600 = vpop.f32.mrf.mxu0
        %1601 = vmatprep.mubr.f32.mxu0 0.0
        %1602 = vmatmul.mubr.f32.gmra.mxu0 %v1455
        %v1603 = vpop.f32.mrf.mxu0
        %v1604 = vadd.f32 0.0, %v1603
        %v1605 = vpop.f32.mrf.mxu0
        %1606 = vmatprep.mubr.f32.mxu0 0.0
        %1607 = vmatmul.mubr.f32.gmra.mxu0 %v1458
        %v1608 = vpop.f32.mrf.mxu0
        %v1609 = vadd.f32 0.0, %v1608
        %v1610 = vpop.f32.mrf.mxu0
        %1611 = vmatprep.mubr.f32.mxu0 0.0
        %1612 = vmatmul.mubr.f32.gmra.mxu0 %v1461
        %v1613 = vpop.f32.mrf.mxu0
        %v1614 = vadd.f32 0.0, %v1613
        %v1615 = vpop.f32.mrf.mxu0
        %1616 = vmatprep.mubr.f32.mxu0 0.0
        %1617 = vmatmul.mubr.f32.gmra.mxu0 %v1464
        %v1618 = vpop.f32.mrf.mxu0
        %v1619 = vadd.f32 0.0, %v1618
        %v1620 = vpop.f32.mrf.mxu0
        %1621 = vmatprep.mubr.f32.mxu0 0.0
        %1622 = vmatmul.mubr.f32.gmra.mxu0 %v1467
        %v1623 = vpop.f32.mrf.mxu0
        %v1624 = vadd.f32 0.0, %v1623
        %v1625 = vpop.f32.mrf.mxu0
        %1626 = vdwg.mxu0
        %v1627 = vadd.f32 %v1377, %v1539
        %v1628 = vadd.f32 %v1378, %v1544
        %v1629 = vadd.f32 %v1379, %v1549
        %v1630 = vadd.f32 %v1380, %v1554
        %v1631 = vadd.f32 %v1381, %v1559
        %v1632 = vadd.f32 %v1382, %v1564
        %v1633 = vadd.f32 %v1383, %v1569
        %v1634 = vadd.f32 %v1384, %v1574
        %v1635 = vadd.f32 %v1385, %v1579
        %v1636 = vadd.f32 %v1386, %v1584
        %v1637 = vadd.f32 %v1387, %v1589
        %v1638 = vadd.f32 %v1388, %v1594
        %v1639 = vadd.f32 %v1389, %v1599
        %v1640 = vadd.f32 %v1390, %v1604
        %v1641 = vadd.f32 %v1391, %v1609
        %v1642 = vadd.f32 %v1392, %v1614
        %v1643 = vadd.f32 %v1393, %v1619
        %v1644 = vadd.f32 %v1394, %v1624
        %v1645 = vld [vmem:[%s179 + $0x24] sm:$0xff]
        %v1646 = vld [vmem:[%s179 + $0x2c] sm:$0xff]
        %v1647 = vld [vmem:[%s179 + $0x34] sm:$0xff]
        %v1648 = vld [vmem:[%s179 + $0x3c] sm:$0xff]
        %v1649 = vld [vmem:[%s179 + $0x44] sm:$0xff]
        %v1650 = vld [vmem:[%s179 + $0x4c] sm:$0xff]
        %v1651 = vld [vmem:[%s179 + $0x54] sm:$0xff]
        %v1652 = vld [vmem:[%s179 + $0x5c] sm:$0xff]
        %v1653 = vld [vmem:[%s179 + $0x64] sm:$0xff]
        %v1654 = vld [vmem:[%s179 + $0x6c] sm:$0xff]
        %v1655 = vld [vmem:[%s179 + $0x74] sm:$0xff]
        %v1656 = vld [vmem:[%s179 + $0x7c] sm:$0xff]
        %v1657 = vld [vmem:[%s179 + $0x84] sm:$0xff]
        %v1658 = vld [vmem:[%s179 + $0x8c] sm:$0xff]
        %v1659 = vld [vmem:[%s179 + $0x94] sm:$0xff]
        %v1660 = vld [vmem:[%s179 + $0x9c] sm:$0xff]
        %v1661 = vld [vmem:[%s179 + $0xa4] sm:$0xff]
        %v1662 = vld [vmem:[%s179 + $0xac] sm:$0xff]
        %s1663 = scalar_lea.vmem %s1, 24
        %v1664 = vld [vmem:[%s1663] sm:$0xf]
        %v1666 = vsel %vm219, %v1645, 0
        %v1669 = vsel %vm219, %v1646, 0
        %v1672 = vsel %vm219, %v1647, 0
        %v1675 = vsel %vm219, %v1648, 0
        %v1678 = vsel %vm219, %v1649, 0
        %v1681 = vsel %vm219, %v1650, 0
        %v1684 = vsel %vm219, %v1651, 0
        %v1687 = vsel %vm219, %v1652, 0
        %v1690 = vsel %vm219, %v1653, 0
        %v1693 = vsel %vm219, %v1654, 0
        %v1696 = vsel %vm219, %v1655, 0
        %v1699 = vsel %vm219, %v1656, 0
        %v1702 = vsel %vm219, %v1657, 0
        %v1705 = vsel %vm219, %v1658, 0
        %v1708 = vsel %vm219, %v1659, 0
        %v1711 = vsel %vm219, %v1660, 0
        %v1714 = vsel %vm219, %v1661, 0
        %v1717 = vsel %vm219, %v1662, 0
        %v1720 = vsel %vm274, %v1664, 0
        %1722 = vmatprep.subr.mxu0 0.0
        %1723 = vmatpush1.msra.mxu0 0.0
        %1724 = vmatprep.subr.mxu0 0.0
        %1725 = vmatpush1.msra.mxu0 0.0
        %1726 = vmatprep.subr.mxu0 0.0
        %1727 = vmatpush1.msra.mxu0 0.0
        %1728 = vmatprep.subr.mxu0 0.0
        %1729 = vmatpush1.msra.mxu0 0.0
        %1730 = vmatprep.subr.mxu0 0.0
        %1731 = vmatpush1.msra.mxu0 0.0
        %1732 = vmatprep.subr.mxu0 0.0
        %1733 = vmatpush1.msra.mxu0 0.0
        %1734 = vmatprep.subr.mxu0 0.0
        %1735 = vmatpush1.msra.mxu0 0.0
        %1736 = vmatprep.subr.mxu0 0.0
        %1737 = vmatpush1.msra.mxu0 0.0
        %1738 = vmatprep.subr.mxu0 0.0
        %1739 = vmatpush1.msra.mxu0 0.0
        %1740 = vmatprep.subr.mxu0 0.0
        %1741 = vmatpush1.msra.mxu0 0.0
        %1742 = vmatprep.subr.mxu0 0.0
        %1743 = vmatpush1.msra.mxu0 0.0
        %1744 = vmatprep.subr.mxu0 0.0
        %1745 = vmatpush1.msra.mxu0 0.0
        %1746 = vmatprep.subr.mxu0 0.0
        %1747 = vmatpush1.msra.mxu0 0.0
        %1748 = vmatprep.subr.mxu0 0.0
        %1749 = vmatpush1.msra.mxu0 0.0
        %1750 = vmatprep.subr.mxu0 0.0
        %1751 = vmatpush1.msra.mxu0 0.0
        %1752 = vmatprep.subr.mxu0 0.0
        %1753 = vmatpush1.msra.mxu0 %v1720
        %1754 = vmatprep.subr.mxu0 0.0
        %1755 = vmatpush2.msra.mxu0 0.0
        %1756 = vmatprep.subr.mxu0 0.0
        %1757 = vmatpush2.msra.mxu0 0.0
        %1758 = vmatprep.subr.mxu0 0.0
        %1759 = vmatpush2.msra.mxu0 0.0
        %1760 = vmatprep.subr.mxu0 0.0
        %1761 = vmatpush2.msra.mxu0 0.0
        %1762 = vmatprep.subr.mxu0 0.0
        %1763 = vmatpush2.msra.mxu0 0.0
        %1764 = vmatprep.subr.mxu0 0.0
        %1765 = vmatpush2.msra.mxu0 0.0
        %1766 = vmatprep.subr.mxu0 0.0
        %1767 = vmatpush2.msra.mxu0 0.0
        %1768 = vmatprep.subr.mxu0 0.0
        %1769 = vmatpush2.msra.mxu0 0.0
        %1770 = vmatprep.subr.mxu0 0.0
        %1771 = vmatpush2.msra.mxu0 0.0
        %1772 = vmatprep.subr.mxu0 0.0
        %1773 = vmatpush2.msra.mxu0 0.0
        %1774 = vmatprep.subr.mxu0 0.0
        %1775 = vmatpush2.msra.mxu0 0.0
        %1776 = vmatprep.subr.mxu0 0.0
        %1777 = vmatpush2.msra.mxu0 0.0
        %1778 = vmatprep.subr.mxu0 0.0
        %1779 = vmatpush2.msra.mxu0 0.0
        %1780 = vmatprep.subr.mxu0 0.0
        %1781 = vmatpush2.msra.mxu0 0.0
        %1782 = vmatprep.subr.mxu0 0.0
        %1783 = vmatpush2.msra.mxu0 0.0
        %1784 = vmatprep.subr.mxu0 0.0
        %1785 = vmatpush2.msra.mxu0 0.0
        %1786 = vmatprep.mubr.f32.mxu0 0.0
        %1787 = vmatmul.mubr.f32.gmra.mxu0 %v1666
        %v1788 = vpop.f32.mrf.mxu0
        %v1789 = vadd.f32 0.0, %v1788
        %v1790 = vpop.f32.mrf.mxu0
        %1791 = vmatprep.mubr.f32.mxu0 0.0
        %1792 = vmatmul.mubr.f32.gmra.mxu0 %v1669
        %v1793 = vpop.f32.mrf.mxu0
        %v1794 = vadd.f32 0.0, %v1793
        %v1795 = vpop.f32.mrf.mxu0
        %1796 = vmatprep.mubr.f32.mxu0 0.0
        %1797 = vmatmul.mubr.f32.gmra.mxu0 %v1672
        %v1798 = vpop.f32.mrf.mxu0
        %v1799 = vadd.f32 0.0, %v1798
        %v1800 = vpop.f32.mrf.mxu0
        %1801 = vmatprep.mubr.f32.mxu0 0.0
        %1802 = vmatmul.mubr.f32.gmra.mxu0 %v1675
        %v1803 = vpop.f32.mrf.mxu0
        %v1804 = vadd.f32 0.0, %v1803
        %v1805 = vpop.f32.mrf.mxu0
        %1806 = vmatprep.mubr.f32.mxu0 0.0
        %1807 = vmatmul.mubr.f32.gmra.mxu0 %v1678
        %v1808 = vpop.f32.mrf.mxu0
        %v1809 = vadd.f32 0.0, %v1808
        %v1810 = vpop.f32.mrf.mxu0
        %1811 = vmatprep.mubr.f32.mxu0 0.0
        %1812 = vmatmul.mubr.f32.gmra.mxu0 %v1681
        %v1813 = vpop.f32.mrf.mxu0
        %v1814 = vadd.f32 0.0, %v1813
        %v1815 = vpop.f32.mrf.mxu0
        %1816 = vmatprep.mubr.f32.mxu0 0.0
        %1817 = vmatmul.mubr.f32.gmra.mxu0 %v1684
        %v1818 = vpop.f32.mrf.mxu0
        %v1819 = vadd.f32 0.0, %v1818
        %v1820 = vpop.f32.mrf.mxu0
        %1821 = vmatprep.mubr.f32.mxu0 0.0
        %1822 = vmatmul.mubr.f32.gmra.mxu0 %v1687
        %v1823 = vpop.f32.mrf.mxu0
        %v1824 = vadd.f32 0.0, %v1823
        %v1825 = vpop.f32.mrf.mxu0
        %1826 = vmatprep.mubr.f32.mxu0 0.0
        %1827 = vmatmul.mubr.f32.gmra.mxu0 %v1690
        %v1828 = vpop.f32.mrf.mxu0
        %v1829 = vadd.f32 0.0, %v1828
        %v1830 = vpop.f32.mrf.mxu0
        %1831 = vmatprep.mubr.f32.mxu0 0.0
        %1832 = vmatmul.mubr.f32.gmra.mxu0 %v1693
        %v1833 = vpop.f32.mrf.mxu0
        %v1834 = vadd.f32 0.0, %v1833
        %v1835 = vpop.f32.mrf.mxu0
        %1836 = vmatprep.mubr.f32.mxu0 0.0
        %1837 = vmatmul.mubr.f32.gmra.mxu0 %v1696
        %v1838 = vpop.f32.mrf.mxu0
        %v1839 = vadd.f32 0.0, %v1838
        %v1840 = vpop.f32.mrf.mxu0
        %1841 = vmatprep.mubr.f32.mxu0 0.0
        %1842 = vmatmul.mubr.f32.gmra.mxu0 %v1699
        %v1843 = vpop.f32.mrf.mxu0
        %v1844 = vadd.f32 0.0, %v1843
        %v1845 = vpop.f32.mrf.mxu0
        %1846 = vmatprep.mubr.f32.mxu0 0.0
        %1847 = vmatmul.mubr.f32.gmra.mxu0 %v1702
        %v1848 = vpop.f32.mrf.mxu0
        %v1849 = vadd.f32 0.0, %v1848
        %v1850 = vpop.f32.mrf.mxu0
        %1851 = vmatprep.mubr.f32.mxu0 0.0
        %1852 = vmatmul.mubr.f32.gmra.mxu0 %v1705
        %v1853 = vpop.f32.mrf.mxu0
        %v1854 = vadd.f32 0.0, %v1853
        %v1855 = vpop.f32.mrf.mxu0
        %1856 = vmatprep.mubr.f32.mxu0 0.0
        %1857 = vmatmul.mubr.f32.gmra.mxu0 %v1708
        %v1858 = vpop.f32.mrf.mxu0
        %v1859 = vadd.f32 0.0, %v1858
        %v1860 = vpop.f32.mrf.mxu0
        %1861 = vmatprep.mubr.f32.mxu0 0.0
        %1862 = vmatmul.mubr.f32.gmra.mxu0 %v1711
        %v1863 = vpop.f32.mrf.mxu0
        %v1864 = vadd.f32 0.0, %v1863
        %v1865 = vpop.f32.mrf.mxu0
        %1866 = vmatprep.mubr.f32.mxu0 0.0
        %1867 = vmatmul.mubr.f32.gmra.mxu0 %v1714
        %v1868 = vpop.f32.mrf.mxu0
        %v1869 = vadd.f32 0.0, %v1868
        %v1870 = vpop.f32.mrf.mxu0
        %1871 = vmatprep.mubr.f32.mxu0 0.0
        %1872 = vmatmul.mubr.f32.gmra.mxu0 %v1717
        %v1873 = vpop.f32.mrf.mxu0
        %v1874 = vadd.f32 0.0, %v1873
        %v1875 = vpop.f32.mrf.mxu0
        %1876 = vdwg.mxu0
        %v1877 = vadd.f32 %v1627, %v1789
        %v1878 = vadd.f32 %v1628, %v1794
        %v1879 = vadd.f32 %v1629, %v1799
        %v1880 = vadd.f32 %v1630, %v1804
        %v1881 = vadd.f32 %v1631, %v1809
        %v1882 = vadd.f32 %v1632, %v1814
        %v1883 = vadd.f32 %v1633, %v1819
        %v1884 = vadd.f32 %v1634, %v1824
        %v1885 = vadd.f32 %v1635, %v1829
        %v1886 = vadd.f32 %v1636, %v1834
        %v1887 = vadd.f32 %v1637, %v1839
        %v1888 = vadd.f32 %v1638, %v1844
        %v1889 = vadd.f32 %v1639, %v1849
        %v1890 = vadd.f32 %v1640, %v1854
        %v1891 = vadd.f32 %v1641, %v1859
        %v1892 = vadd.f32 %v1642, %v1864
        %v1893 = vadd.f32 %v1643, %v1869
        %v1894 = vadd.f32 %v1644, %v1874
        %v1895 = vld [vmem:[%s179 + $0x25] sm:$0xff]
        %v1896 = vld [vmem:[%s179 + $0x2d] sm:$0xff]
        %v1897 = vld [vmem:[%s179 + $0x35] sm:$0xff]
        %v1898 = vld [vmem:[%s179 + $0x3d] sm:$0xff]
        %v1899 = vld [vmem:[%s179 + $0x45] sm:$0xff]
        %v1900 = vld [vmem:[%s179 + $0x4d] sm:$0xff]
        %v1901 = vld [vmem:[%s179 + $0x55] sm:$0xff]
        %v1902 = vld [vmem:[%s179 + $0x5d] sm:$0xff]
        %v1903 = vld [vmem:[%s179 + $0x65] sm:$0xff]
        %v1904 = vld [vmem:[%s179 + $0x6d] sm:$0xff]
        %v1905 = vld [vmem:[%s179 + $0x75] sm:$0xff]
        %v1906 = vld [vmem:[%s179 + $0x7d] sm:$0xff]
        %v1907 = vld [vmem:[%s179 + $0x85] sm:$0xff]
        %v1908 = vld [vmem:[%s179 + $0x8d] sm:$0xff]
        %v1909 = vld [vmem:[%s179 + $0x95] sm:$0xff]
        %v1910 = vld [vmem:[%s179 + $0x9d] sm:$0xff]
        %v1911 = vld [vmem:[%s179 + $0xa5] sm:$0xff]
        %v1912 = vld [vmem:[%s179 + $0xad] sm:$0xff]
        %s1913 = scalar_lea.vmem %s1, 28
        %v1914 = vld [vmem:[%s1913] sm:$0xf]
        %v1916 = vsel %vm219, %v1895, 0
        %v1919 = vsel %vm219, %v1896, 0
        %v1922 = vsel %vm219, %v1897, 0
        %v1925 = vsel %vm219, %v1898, 0
        %v1928 = vsel %vm219, %v1899, 0
        %v1931 = vsel %vm219, %v1900, 0
        %v1934 = vsel %vm219, %v1901, 0
        %v1937 = vsel %vm219, %v1902, 0
        %v1940 = vsel %vm219, %v1903, 0
        %v1943 = vsel %vm219, %v1904, 0
        %v1946 = vsel %vm219, %v1905, 0
        %v1949 = vsel %vm219, %v1906, 0
        %v1952 = vsel %vm219, %v1907, 0
        %v1955 = vsel %vm219, %v1908, 0
        %v1958 = vsel %vm219, %v1909, 0
        %v1961 = vsel %vm219, %v1910, 0
        %v1964 = vsel %vm219, %v1911, 0
        %v1967 = vsel %vm219, %v1912, 0
        %v1970 = vsel %vm274, %v1914, 0
        %1972 = vmatprep.subr.mxu0 0.0
        %1973 = vmatpush1.msra.mxu0 0.0
        %1974 = vmatprep.subr.mxu0 0.0
        %1975 = vmatpush1.msra.mxu0 0.0
        %1976 = vmatprep.subr.mxu0 0.0
        %1977 = vmatpush1.msra.mxu0 0.0
        %1978 = vmatprep.subr.mxu0 0.0
        %1979 = vmatpush1.msra.mxu0 0.0
        %1980 = vmatprep.subr.mxu0 0.0
        %1981 = vmatpush1.msra.mxu0 0.0
        %1982 = vmatprep.subr.mxu0 0.0
        %1983 = vmatpush1.msra.mxu0 0.0
        %1984 = vmatprep.subr.mxu0 0.0
        %1985 = vmatpush1.msra.mxu0 0.0
        %1986 = vmatprep.subr.mxu0 0.0
        %1987 = vmatpush1.msra.mxu0 0.0
        %1988 = vmatprep.subr.mxu0 0.0
        %1989 = vmatpush1.msra.mxu0 0.0
        %1990 = vmatprep.subr.mxu0 0.0
        %1991 = vmatpush1.msra.mxu0 0.0
        %1992 = vmatprep.subr.mxu0 0.0
        %1993 = vmatpush1.msra.mxu0 0.0
        %1994 = vmatprep.subr.mxu0 0.0
        %1995 = vmatpush1.msra.mxu0 0.0
        %1996 = vmatprep.subr.mxu0 0.0
        %1997 = vmatpush1.msra.mxu0 0.0
        %1998 = vmatprep.subr.mxu0 0.0
        %1999 = vmatpush1.msra.mxu0 0.0
        %2000 = vmatprep.subr.mxu0 0.0
        %2001 = vmatpush1.msra.mxu0 0.0
        %2002 = vmatprep.subr.mxu0 0.0
        %2003 = vmatpush1.msra.mxu0 %v1970
        %2004 = vmatprep.subr.mxu0 0.0
        %2005 = vmatpush2.msra.mxu0 0.0
        %2006 = vmatprep.subr.mxu0 0.0
        %2007 = vmatpush2.msra.mxu0 0.0
        %2008 = vmatprep.subr.mxu0 0.0
        %2009 = vmatpush2.msra.mxu0 0.0
        %2010 = vmatprep.subr.mxu0 0.0
        %2011 = vmatpush2.msra.mxu0 0.0
        %2012 = vmatprep.subr.mxu0 0.0
        %2013 = vmatpush2.msra.mxu0 0.0
        %2014 = vmatprep.subr.mxu0 0.0
        %2015 = vmatpush2.msra.mxu0 0.0
        %2016 = vmatprep.subr.mxu0 0.0
        %2017 = vmatpush2.msra.mxu0 0.0
        %2018 = vmatprep.subr.mxu0 0.0
        %2019 = vmatpush2.msra.mxu0 0.0
        %2020 = vmatprep.subr.mxu0 0.0
        %2021 = vmatpush2.msra.mxu0 0.0
        %2022 = vmatprep.subr.mxu0 0.0
        %2023 = vmatpush2.msra.mxu0 0.0
        %2024 = vmatprep.subr.mxu0 0.0
        %2025 = vmatpush2.msra.mxu0 0.0
        %2026 = vmatprep.subr.mxu0 0.0
        %2027 = vmatpush2.msra.mxu0 0.0
        %2028 = vmatprep.subr.mxu0 0.0
        %2029 = vmatpush2.msra.mxu0 0.0
        %2030 = vmatprep.subr.mxu0 0.0
        %2031 = vmatpush2.msra.mxu0 0.0
        %2032 = vmatprep.subr.mxu0 0.0
        %2033 = vmatpush2.msra.mxu0 0.0
        %2034 = vmatprep.subr.mxu0 0.0
        %2035 = vmatpush2.msra.mxu0 0.0
        %2036 = vmatprep.mubr.f32.mxu0 0.0
        %2037 = vmatmul.mubr.f32.gmra.mxu0 %v1916
        %v2038 = vpop.f32.mrf.mxu0
        %v2039 = vadd.f32 0.0, %v2038
        %v2040 = vpop.f32.mrf.mxu0
        %2041 = vmatprep.mubr.f32.mxu0 0.0
        %2042 = vmatmul.mubr.f32.gmra.mxu0 %v1919
        %v2043 = vpop.f32.mrf.mxu0
        %v2044 = vadd.f32 0.0, %v2043
        %v2045 = vpop.f32.mrf.mxu0
        %2046 = vmatprep.mubr.f32.mxu0 0.0
        %2047 = vmatmul.mubr.f32.gmra.mxu0 %v1922
        %v2048 = vpop.f32.mrf.mxu0
        %v2049 = vadd.f32 0.0, %v2048
        %v2050 = vpop.f32.mrf.mxu0
        %2051 = vmatprep.mubr.f32.mxu0 0.0
        %2052 = vmatmul.mubr.f32.gmra.mxu0 %v1925
        %v2053 = vpop.f32.mrf.mxu0
        %v2054 = vadd.f32 0.0, %v2053
        %v2055 = vpop.f32.mrf.mxu0
        %2056 = vmatprep.mubr.f32.mxu0 0.0
        %2057 = vmatmul.mubr.f32.gmra.mxu0 %v1928
        %v2058 = vpop.f32.mrf.mxu0
        %v2059 = vadd.f32 0.0, %v2058
        %v2060 = vpop.f32.mrf.mxu0
        %2061 = vmatprep.mubr.f32.mxu0 0.0
        %2062 = vmatmul.mubr.f32.gmra.mxu0 %v1931
        %v2063 = vpop.f32.mrf.mxu0
        %v2064 = vadd.f32 0.0, %v2063
        %v2065 = vpop.f32.mrf.mxu0
        %2066 = vmatprep.mubr.f32.mxu0 0.0
        %2067 = vmatmul.mubr.f32.gmra.mxu0 %v1934
        %v2068 = vpop.f32.mrf.mxu0
        %v2069 = vadd.f32 0.0, %v2068
        %v2070 = vpop.f32.mrf.mxu0
        %2071 = vmatprep.mubr.f32.mxu0 0.0
        %2072 = vmatmul.mubr.f32.gmra.mxu0 %v1937
        %v2073 = vpop.f32.mrf.mxu0
        %v2074 = vadd.f32 0.0, %v2073
        %v2075 = vpop.f32.mrf.mxu0
        %2076 = vmatprep.mubr.f32.mxu0 0.0
        %2077 = vmatmul.mubr.f32.gmra.mxu0 %v1940
        %v2078 = vpop.f32.mrf.mxu0
        %v2079 = vadd.f32 0.0, %v2078
        %v2080 = vpop.f32.mrf.mxu0
        %2081 = vmatprep.mubr.f32.mxu0 0.0
        %2082 = vmatmul.mubr.f32.gmra.mxu0 %v1943
        %v2083 = vpop.f32.mrf.mxu0
        %v2084 = vadd.f32 0.0, %v2083
        %v2085 = vpop.f32.mrf.mxu0
        %2086 = vmatprep.mubr.f32.mxu0 0.0
        %2087 = vmatmul.mubr.f32.gmra.mxu0 %v1946
        %v2088 = vpop.f32.mrf.mxu0
        %v2089 = vadd.f32 0.0, %v2088
        %v2090 = vpop.f32.mrf.mxu0
        %2091 = vmatprep.mubr.f32.mxu0 0.0
        %2092 = vmatmul.mubr.f32.gmra.mxu0 %v1949
        %v2093 = vpop.f32.mrf.mxu0
        %v2094 = vadd.f32 0.0, %v2093
        %v2095 = vpop.f32.mrf.mxu0
        %2096 = vmatprep.mubr.f32.mxu0 0.0
        %2097 = vmatmul.mubr.f32.gmra.mxu0 %v1952
        %v2098 = vpop.f32.mrf.mxu0
        %v2099 = vadd.f32 0.0, %v2098
        %v2100 = vpop.f32.mrf.mxu0
        %2101 = vmatprep.mubr.f32.mxu0 0.0
        %2102 = vmatmul.mubr.f32.gmra.mxu0 %v1955
        %v2103 = vpop.f32.mrf.mxu0
        %v2104 = vadd.f32 0.0, %v2103
        %v2105 = vpop.f32.mrf.mxu0
        %2106 = vmatprep.mubr.f32.mxu0 0.0
        %2107 = vmatmul.mubr.f32.gmra.mxu0 %v1958
        %v2108 = vpop.f32.mrf.mxu0
        %v2109 = vadd.f32 0.0, %v2108
        %v2110 = vpop.f32.mrf.mxu0
        %2111 = vmatprep.mubr.f32.mxu0 0.0
        %2112 = vmatmul.mubr.f32.gmra.mxu0 %v1961
        %v2113 = vpop.f32.mrf.mxu0
        %v2114 = vadd.f32 0.0, %v2113
        %v2115 = vpop.f32.mrf.mxu0
        %2116 = vmatprep.mubr.f32.mxu0 0.0
        %2117 = vmatmul.mubr.f32.gmra.mxu0 %v1964
        %v2118 = vpop.f32.mrf.mxu0
        %v2119 = vadd.f32 0.0, %v2118
        %v2120 = vpop.f32.mrf.mxu0
        %2121 = vmatprep.mubr.f32.mxu0 0.0
        %2122 = vmatmul.mubr.f32.gmra.mxu0 %v1967
        %v2123 = vpop.f32.mrf.mxu0
        %v2124 = vadd.f32 0.0, %v2123
        %v2125 = vpop.f32.mrf.mxu0
        %2126 = vdwg.mxu0
        %v2127 = vadd.f32 %v1877, %v2039
        %v2128 = vadd.f32 %v1878, %v2044
        %v2129 = vadd.f32 %v1879, %v2049
        %v2130 = vadd.f32 %v1880, %v2054
        %v2131 = vadd.f32 %v1881, %v2059
        %v2132 = vadd.f32 %v1882, %v2064
        %v2133 = vadd.f32 %v1883, %v2069
        %v2134 = vadd.f32 %v1884, %v2074
        %v2135 = vadd.f32 %v1885, %v2079
        %v2136 = vadd.f32 %v1886, %v2084
        %v2137 = vadd.f32 %v1887, %v2089
        %v2138 = vadd.f32 %v1888, %v2094
        %v2139 = vadd.f32 %v1889, %v2099
        %v2140 = vadd.f32 %v1890, %v2104
        %v2141 = vadd.f32 %v1891, %v2109
        %v2142 = vadd.f32 %v1892, %v2114
        %v2143 = vadd.f32 %v1893, %v2119
        %v2144 = vadd.f32 %v1894, %v2124
        %v2145 = vld [vmem:[%s179 + $0x26] sm:$0xff]
        %v2146 = vld [vmem:[%s179 + $0x2e] sm:$0xff]
        %v2147 = vld [vmem:[%s179 + $0x36] sm:$0xff]
        %v2148 = vld [vmem:[%s179 + $0x3e] sm:$0xff]
        %v2149 = vld [vmem:[%s179 + $0x46] sm:$0xff]
        %v2150 = vld [vmem:[%s179 + $0x4e] sm:$0xff]
        %v2151 = vld [vmem:[%s179 + $0x56] sm:$0xff]
        %v2152 = vld [vmem:[%s179 + $0x5e] sm:$0xff]
        %v2153 = vld [vmem:[%s179 + $0x66] sm:$0xff]
        %v2154 = vld [vmem:[%s179 + $0x6e] sm:$0xff]
        %v2155 = vld [vmem:[%s179 + $0x76] sm:$0xff]
        %v2156 = vld [vmem:[%s179 + $0x7e] sm:$0xff]
        %v2157 = vld [vmem:[%s179 + $0x86] sm:$0xff]
        %v2158 = vld [vmem:[%s179 + $0x8e] sm:$0xff]
        %v2159 = vld [vmem:[%s179 + $0x96] sm:$0xff]
        %v2160 = vld [vmem:[%s179 + $0x9e] sm:$0xff]
        %v2161 = vld [vmem:[%s179 + $0xa6] sm:$0xff]
        %v2162 = vld [vmem:[%s179 + $0xae] sm:$0xff]
        %s2163 = scalar_lea.vmem %s1, 32
        %v2164 = vld [vmem:[%s2163] sm:$0xf]
        %v2166 = vsel %vm219, %v2145, 0
        %v2169 = vsel %vm219, %v2146, 0
        %v2172 = vsel %vm219, %v2147, 0
        %v2175 = vsel %vm219, %v2148, 0
        %v2178 = vsel %vm219, %v2149, 0
        %v2181 = vsel %vm219, %v2150, 0
        %v2184 = vsel %vm219, %v2151, 0
        %v2187 = vsel %vm219, %v2152, 0
        %v2190 = vsel %vm219, %v2153, 0
        %v2193 = vsel %vm219, %v2154, 0
        %v2196 = vsel %vm219, %v2155, 0
        %v2199 = vsel %vm219, %v2156, 0
        %v2202 = vsel %vm219, %v2157, 0
        %v2205 = vsel %vm219, %v2158, 0
        %v2208 = vsel %vm219, %v2159, 0
        %v2211 = vsel %vm219, %v2160, 0
        %v2214 = vsel %vm219, %v2161, 0
        %v2217 = vsel %vm219, %v2162, 0
        %v2220 = vsel %vm274, %v2164, 0
        %2222 = vmatprep.subr.mxu0 0.0
        %2223 = vmatpush1.msra.mxu0 0.0
        %2224 = vmatprep.subr.mxu0 0.0
        %2225 = vmatpush1.msra.mxu0 0.0
        %2226 = vmatprep.subr.mxu0 0.0
        %2227 = vmatpush1.msra.mxu0 0.0
        %2228 = vmatprep.subr.mxu0 0.0
        %2229 = vmatpush1.msra.mxu0 0.0
        %2230 = vmatprep.subr.mxu0 0.0
        %2231 = vmatpush1.msra.mxu0 0.0
        %2232 = vmatprep.subr.mxu0 0.0
        %2233 = vmatpush1.msra.mxu0 0.0
        %2234 = vmatprep.subr.mxu0 0.0
        %2235 = vmatpush1.msra.mxu0 0.0
        %2236 = vmatprep.subr.mxu0 0.0
        %2237 = vmatpush1.msra.mxu0 0.0
        %2238 = vmatprep.subr.mxu0 0.0
        %2239 = vmatpush1.msra.mxu0 0.0
        %2240 = vmatprep.subr.mxu0 0.0
        %2241 = vmatpush1.msra.mxu0 0.0
        %2242 = vmatprep.subr.mxu0 0.0
        %2243 = vmatpush1.msra.mxu0 0.0
        %2244 = vmatprep.subr.mxu0 0.0
        %2245 = vmatpush1.msra.mxu0 0.0
        %2246 = vmatprep.subr.mxu0 0.0
        %2247 = vmatpush1.msra.mxu0 0.0
        %2248 = vmatprep.subr.mxu0 0.0
        %2249 = vmatpush1.msra.mxu0 0.0
        %2250 = vmatprep.subr.mxu0 0.0
        %2251 = vmatpush1.msra.mxu0 0.0
        %2252 = vmatprep.subr.mxu0 0.0
        %2253 = vmatpush1.msra.mxu0 %v2220
        %2254 = vmatprep.subr.mxu0 0.0
        %2255 = vmatpush2.msra.mxu0 0.0
        %2256 = vmatprep.subr.mxu0 0.0
        %2257 = vmatpush2.msra.mxu0 0.0
        %2258 = vmatprep.subr.mxu0 0.0
        %2259 = vmatpush2.msra.mxu0 0.0
        %2260 = vmatprep.subr.mxu0 0.0
        %2261 = vmatpush2.msra.mxu0 0.0
        %2262 = vmatprep.subr.mxu0 0.0
        %2263 = vmatpush2.msra.mxu0 0.0
        %2264 = vmatprep.subr.mxu0 0.0
        %2265 = vmatpush2.msra.mxu0 0.0
        %2266 = vmatprep.subr.mxu0 0.0
        %2267 = vmatpush2.msra.mxu0 0.0
        %2268 = vmatprep.subr.mxu0 0.0
        %2269 = vmatpush2.msra.mxu0 0.0
        %2270 = vmatprep.subr.mxu0 0.0
        %2271 = vmatpush2.msra.mxu0 0.0
        %2272 = vmatprep.subr.mxu0 0.0
        %2273 = vmatpush2.msra.mxu0 0.0
        %2274 = vmatprep.subr.mxu0 0.0
        %2275 = vmatpush2.msra.mxu0 0.0
        %2276 = vmatprep.subr.mxu0 0.0
        %2277 = vmatpush2.msra.mxu0 0.0
        %2278 = vmatprep.subr.mxu0 0.0
        %2279 = vmatpush2.msra.mxu0 0.0
        %2280 = vmatprep.subr.mxu0 0.0
        %2281 = vmatpush2.msra.mxu0 0.0
        %2282 = vmatprep.subr.mxu0 0.0
        %2283 = vmatpush2.msra.mxu0 0.0
        %2284 = vmatprep.subr.mxu0 0.0
        %2285 = vmatpush2.msra.mxu0 0.0
        %2286 = vmatprep.mubr.f32.mxu0 0.0
        %2287 = vmatmul.mubr.f32.gmra.mxu0 %v2166
        %v2288 = vpop.f32.mrf.mxu0
        %v2289 = vadd.f32 0.0, %v2288
        %v2290 = vpop.f32.mrf.mxu0
        %2291 = vmatprep.mubr.f32.mxu0 0.0
        %2292 = vmatmul.mubr.f32.gmra.mxu0 %v2169
        %v2293 = vpop.f32.mrf.mxu0
        %v2294 = vadd.f32 0.0, %v2293
        %v2295 = vpop.f32.mrf.mxu0
        %2296 = vmatprep.mubr.f32.mxu0 0.0
        %2297 = vmatmul.mubr.f32.gmra.mxu0 %v2172
        %v2298 = vpop.f32.mrf.mxu0
        %v2299 = vadd.f32 0.0, %v2298
        %v2300 = vpop.f32.mrf.mxu0
        %2301 = vmatprep.mubr.f32.mxu0 0.0
        %2302 = vmatmul.mubr.f32.gmra.mxu0 %v2175
        %v2303 = vpop.f32.mrf.mxu0
        %v2304 = vadd.f32 0.0, %v2303
        %v2305 = vpop.f32.mrf.mxu0
        %2306 = vmatprep.mubr.f32.mxu0 0.0
        %2307 = vmatmul.mubr.f32.gmra.mxu0 %v2178
        %v2308 = vpop.f32.mrf.mxu0
        %v2309 = vadd.f32 0.0, %v2308
        %v2310 = vpop.f32.mrf.mxu0
        %2311 = vmatprep.mubr.f32.mxu0 0.0
        %2312 = vmatmul.mubr.f32.gmra.mxu0 %v2181
        %v2313 = vpop.f32.mrf.mxu0
        %v2314 = vadd.f32 0.0, %v2313
        %v2315 = vpop.f32.mrf.mxu0
        %2316 = vmatprep.mubr.f32.mxu0 0.0
        %2317 = vmatmul.mubr.f32.gmra.mxu0 %v2184
        %v2318 = vpop.f32.mrf.mxu0
        %v2319 = vadd.f32 0.0, %v2318
        %v2320 = vpop.f32.mrf.mxu0
        %2321 = vmatprep.mubr.f32.mxu0 0.0
        %2322 = vmatmul.mubr.f32.gmra.mxu0 %v2187
        %v2323 = vpop.f32.mrf.mxu0
        %v2324 = vadd.f32 0.0, %v2323
        %v2325 = vpop.f32.mrf.mxu0
        %2326 = vmatprep.mubr.f32.mxu0 0.0
        %2327 = vmatmul.mubr.f32.gmra.mxu0 %v2190
        %v2328 = vpop.f32.mrf.mxu0
        %v2329 = vadd.f32 0.0, %v2328
        %v2330 = vpop.f32.mrf.mxu0
        %2331 = vmatprep.mubr.f32.mxu0 0.0
        %2332 = vmatmul.mubr.f32.gmra.mxu0 %v2193
        %v2333 = vpop.f32.mrf.mxu0
        %v2334 = vadd.f32 0.0, %v2333
        %v2335 = vpop.f32.mrf.mxu0
        %2336 = vmatprep.mubr.f32.mxu0 0.0
        %2337 = vmatmul.mubr.f32.gmra.mxu0 %v2196
        %v2338 = vpop.f32.mrf.mxu0
        %v2339 = vadd.f32 0.0, %v2338
        %v2340 = vpop.f32.mrf.mxu0
        %2341 = vmatprep.mubr.f32.mxu0 0.0
        %2342 = vmatmul.mubr.f32.gmra.mxu0 %v2199
        %v2343 = vpop.f32.mrf.mxu0
        %v2344 = vadd.f32 0.0, %v2343
        %v2345 = vpop.f32.mrf.mxu0
        %2346 = vmatprep.mubr.f32.mxu0 0.0
        %2347 = vmatmul.mubr.f32.gmra.mxu0 %v2202
        %v2348 = vpop.f32.mrf.mxu0
        %v2349 = vadd.f32 0.0, %v2348
        %v2350 = vpop.f32.mrf.mxu0
        %2351 = vmatprep.mubr.f32.mxu0 0.0
        %2352 = vmatmul.mubr.f32.gmra.mxu0 %v2205
        %v2353 = vpop.f32.mrf.mxu0
        %v2354 = vadd.f32 0.0, %v2353
        %v2355 = vpop.f32.mrf.mxu0
        %2356 = vmatprep.mubr.f32.mxu0 0.0
        %2357 = vmatmul.mubr.f32.gmra.mxu0 %v2208
        %v2358 = vpop.f32.mrf.mxu0
        %v2359 = vadd.f32 0.0, %v2358
        %v2360 = vpop.f32.mrf.mxu0
        %2361 = vmatprep.mubr.f32.mxu0 0.0
        %2362 = vmatmul.mubr.f32.gmra.mxu0 %v2211
        %v2363 = vpop.f32.mrf.mxu0
        %v2364 = vadd.f32 0.0, %v2363
        %v2365 = vpop.f32.mrf.mxu0
        %2366 = vmatprep.mubr.f32.mxu0 0.0
        %2367 = vmatmul.mubr.f32.gmra.mxu0 %v2214
        %v2368 = vpop.f32.mrf.mxu0
        %v2369 = vadd.f32 0.0, %v2368
        %v2370 = vpop.f32.mrf.mxu0
        %2371 = vmatprep.mubr.f32.mxu0 0.0
        %2372 = vmatmul.mubr.f32.gmra.mxu0 %v2217
        %v2373 = vpop.f32.mrf.mxu0
        %v2374 = vadd.f32 0.0, %v2373
        %v2375 = vpop.f32.mrf.mxu0
        %2376 = vdwg.mxu0
        %v2377 = vadd.f32 %v2127, %v2289
        %v2378 = vadd.f32 %v2128, %v2294
        %v2379 = vadd.f32 %v2129, %v2299
        %v2380 = vadd.f32 %v2130, %v2304
        %v2381 = vadd.f32 %v2131, %v2309
        %v2382 = vadd.f32 %v2132, %v2314
        %v2383 = vadd.f32 %v2133, %v2319
        %v2384 = vadd.f32 %v2134, %v2324
        %v2385 = vadd.f32 %v2135, %v2329
        %v2386 = vadd.f32 %v2136, %v2334
        %v2387 = vadd.f32 %v2137, %v2339
        %v2388 = vadd.f32 %v2138, %v2344
        %v2389 = vadd.f32 %v2139, %v2349
        %v2390 = vadd.f32 %v2140, %v2354
        %v2391 = vadd.f32 %v2141, %v2359
        %v2392 = vadd.f32 %v2142, %v2364
        %v2393 = vadd.f32 %v2143, %v2369
        %v2394 = vadd.f32 %v2144, %v2374
        %2395 = vst [vmem:[%s167] sm:$0xff] %v2377
        %2396 = vst [vmem:[%s167 + $0x8] sm:$0xff] %v2378
        %2397 = vst [vmem:[%s167 + $0x10] sm:$0xff] %v2379
        %2398 = vst [vmem:[%s167 + $0x18] sm:$0xff] %v2380
        %2399 = vst [vmem:[%s167 + $0x20] sm:$0xff] %v2381
        %2400 = vst [vmem:[%s167 + $0x28] sm:$0xff] %v2382
        %2401 = vst [vmem:[%s167 + $0x30] sm:$0xff] %v2383
        %2402 = vst [vmem:[%s167 + $0x38] sm:$0xff] %v2384
        %2403 = vst [vmem:[%s167 + $0x40] sm:$0xff] %v2385
        %2404 = vst [vmem:[%s167 + $0x48] sm:$0xff] %v2386
        %2405 = vst [vmem:[%s167 + $0x50] sm:$0xff] %v2387
        %2406 = vst [vmem:[%s167 + $0x58] sm:$0xff] %v2388
        %2407 = vst [vmem:[%s167 + $0x60] sm:$0xff] %v2389
        %2408 = vst [vmem:[%s167 + $0x68] sm:$0xff] %v2390
        %2409 = vst [vmem:[%s167 + $0x70] sm:$0xff] %v2391
        %2410 = vst [vmem:[%s167 + $0x78] sm:$0xff] %v2392
        %2411 = vst [vmem:[%s167 + $0x80] sm:$0xff] %v2393
        %2412 = vst [vmem:[%s167 + $0x88] sm:$0xff] %v2394
        %v2413 = vlaneseq
        %v2414 = vshrl.u32 %v2413, 7
        %v2415 = vadd.s32 %v2414, 8
        %v2416 = vadd.s32 %v2414, 16
        %v2417 = vadd.s32 %v2414, 24
        %v2418 = vadd.s32 %v2414, 32
        %v2419 = vadd.s32 %v2414, 40
        %v2420 = vadd.s32 %v2414, 48
        %v2421 = vadd.s32 %v2414, 56
        %v2422 = vadd.s32 %v2414, 64
        %v2423 = vadd.s32 %v2414, 72
        %v2424 = vadd.s32 %v2414, 80
        %v2425 = vadd.s32 %v2414, 88
        %v2426 = vadd.s32 %v2414, 96
        %v2427 = vadd.s32 %v2414, 104
        %v2428 = vadd.s32 %v2414, 112
        %v2429 = vadd.s32 %v2414, 120
        %v2430 = vadd.s32 %v2414, 128
        %v2431 = vadd.s32 %v2414, 136
        %vm2432 = vcmp.lt.s32.totalorder %v2414, 0
        %v2433 = vsub.s32 0, %v2414
        %v2434 = vsel %vm2432, %v2433, %v2414
        %v2435 = vmul.u32.u64.compose %v2434, 3817748708
        %v2436 = vextract.low.u32 %v2435
        %v2437 = vextract.high.u32 %v2435
        %v2438 = vshrl.u32 %v2437, 4
        %v2439 = vmul.u32 %v2438, 18
        %v2440 = vsub.s32 %v2434, %v2439
        %v2441 = vsub.s32 0, %v2440
        %v2442 = vsel %vm2432, %v2441, %v2440
        %vm2443 = vcmp.lt.s32.totalorder %v2415, 0
        %v2444 = vsub.s32 0, %v2415
        %v2445 = vsel %vm2443, %v2444, %v2415
        %v2446 = vmul.u32.u64.compose %v2445, 3817748708
        %v2447 = vextract.low.u32 %v2446
        %v2448 = vextract.high.u32 %v2446
        %v2449 = vshrl.u32 %v2448, 4
        %v2450 = vmul.u32 %v2449, 18
        %v2451 = vsub.s32 %v2445, %v2450
        %v2452 = vsub.s32 0, %v2451
        %v2453 = vsel %vm2443, %v2452, %v2451
        %vm2454 = vcmp.lt.s32.totalorder %v2416, 0
        %v2455 = vsub.s32 0, %v2416
        %v2456 = vsel %vm2454, %v2455, %v2416
        %v2457 = vmul.u32.u64.compose %v2456, 3817748708
        %v2458 = vextract.low.u32 %v2457
        %v2459 = vextract.high.u32 %v2457
        %v2460 = vshrl.u32 %v2459, 4
        %v2461 = vmul.u32 %v2460, 18
        %v2462 = vsub.s32 %v2456, %v2461
        %v2463 = vsub.s32 0, %v2462
        %v2464 = vsel %vm2454, %v2463, %v2462
        %vm2465 = vcmp.lt.s32.totalorder %v2417, 0
        %v2466 = vsub.s32 0, %v2417
        %v2467 = vsel %vm2465, %v2466, %v2417
        %v2468 = vmul.u32.u64.compose %v2467, 3817748708
        %v2469 = vextract.low.u32 %v2468
        %v2470 = vextract.high.u32 %v2468
        %v2471 = vshrl.u32 %v2470, 4
        %v2472 = vmul.u32 %v2471, 18
        %v2473 = vsub.s32 %v2467, %v2472
        %v2474 = vsub.s32 0, %v2473
        %v2475 = vsel %vm2465, %v2474, %v2473
        %vm2476 = vcmp.lt.s32.totalorder %v2418, 0
        %v2477 = vsub.s32 0, %v2418
        %v2478 = vsel %vm2476, %v2477, %v2418
        %v2479 = vmul.u32.u64.compose %v2478, 3817748708
        %v2480 = vextract.low.u32 %v2479
        %v2481 = vextract.high.u32 %v2479
        %v2482 = vshrl.u32 %v2481, 4
        %v2483 = vmul.u32 %v2482, 18
        %v2484 = vsub.s32 %v2478, %v2483
        %v2485 = vsub.s32 0, %v2484
        %v2486 = vsel %vm2476, %v2485, %v2484
        %vm2487 = vcmp.lt.s32.totalorder %v2419, 0
        %v2488 = vsub.s32 0, %v2419
        %v2489 = vsel %vm2487, %v2488, %v2419
        %v2490 = vmul.u32.u64.compose %v2489, 3817748708
        %v2491 = vextract.low.u32 %v2490
        %v2492 = vextract.high.u32 %v2490
        %v2493 = vshrl.u32 %v2492, 4
        %v2494 = vmul.u32 %v2493, 18
        %v2495 = vsub.s32 %v2489, %v2494
        %v2496 = vsub.s32 0, %v2495
        %v2497 = vsel %vm2487, %v2496, %v2495
        %vm2498 = vcmp.lt.s32.totalorder %v2420, 0
        %v2499 = vsub.s32 0, %v2420
        %v2500 = vsel %vm2498, %v2499, %v2420
        %v2501 = vmul.u32.u64.compose %v2500, 3817748708
        %v2502 = vextract.low.u32 %v2501
        %v2503 = vextract.high.u32 %v2501
        %v2504 = vshrl.u32 %v2503, 4
        %v2505 = vmul.u32 %v2504, 18
        %v2506 = vsub.s32 %v2500, %v2505
        %v2507 = vsub.s32 0, %v2506
        %v2508 = vsel %vm2498, %v2507, %v2506
        %vm2509 = vcmp.lt.s32.totalorder %v2421, 0
        %v2510 = vsub.s32 0, %v2421
        %v2511 = vsel %vm2509, %v2510, %v2421
        %v2512 = vmul.u32.u64.compose %v2511, 3817748708
        %v2513 = vextract.low.u32 %v2512
        %v2514 = vextract.high.u32 %v2512
        %v2515 = vshrl.u32 %v2514, 4
        %v2516 = vmul.u32 %v2515, 18
        %v2517 = vsub.s32 %v2511, %v2516
        %v2518 = vsub.s32 0, %v2517
        %v2519 = vsel %vm2509, %v2518, %v2517
        %vm2520 = vcmp.lt.s32.totalorder %v2422, 0
        %v2521 = vsub.s32 0, %v2422
        %v2522 = vsel %vm2520, %v2521, %v2422
        %v2523 = vmul.u32.u64.compose %v2522, 3817748708
        %v2524 = vextract.low.u32 %v2523
        %v2525 = vextract.high.u32 %v2523
        %v2526 = vshrl.u32 %v2525, 4
        %v2527 = vmul.u32 %v2526, 18
        %v2528 = vsub.s32 %v2522, %v2527
        %v2529 = vsub.s32 0, %v2528
        %v2530 = vsel %vm2520, %v2529, %v2528
        %vm2531 = vcmp.lt.s32.totalorder %v2423, 0
        %v2532 = vsub.s32 0, %v2423
        %v2533 = vsel %vm2531, %v2532, %v2423
        %v2534 = vmul.u32.u64.compose %v2533, 3817748708
        %v2535 = vextract.low.u32 %v2534
        %v2536 = vextract.high.u32 %v2534
        %v2537 = vshrl.u32 %v2536, 4
        %v2538 = vmul.u32 %v2537, 18
        %v2539 = vsub.s32 %v2533, %v2538
        %v2540 = vsub.s32 0, %v2539
        %v2541 = vsel %vm2531, %v2540, %v2539
        %vm2542 = vcmp.lt.s32.totalorder %v2424, 0
        %v2543 = vsub.s32 0, %v2424
        %v2544 = vsel %vm2542, %v2543, %v2424
        %v2545 = vmul.u32.u64.compose %v2544, 3817748708
        %v2546 = vextract.low.u32 %v2545
        %v2547 = vextract.high.u32 %v2545
        %v2548 = vshrl.u32 %v2547, 4
        %v2549 = vmul.u32 %v2548, 18
        %v2550 = vsub.s32 %v2544, %v2549
        %v2551 = vsub.s32 0, %v2550
        %v2552 = vsel %vm2542, %v2551, %v2550
        %vm2553 = vcmp.lt.s32.totalorder %v2425, 0
        %v2554 = vsub.s32 0, %v2425
        %v2555 = vsel %vm2553, %v2554, %v2425
        %v2556 = vmul.u32.u64.compose %v2555, 3817748708
        %v2557 = vextract.low.u32 %v2556
        %v2558 = vextract.high.u32 %v2556
        %v2559 = vshrl.u32 %v2558, 4
        %v2560 = vmul.u32 %v2559, 18
        %v2561 = vsub.s32 %v2555, %v2560
        %v2562 = vsub.s32 0, %v2561
        %v2563 = vsel %vm2553, %v2562, %v2561
        %vm2564 = vcmp.lt.s32.totalorder %v2426, 0
        %v2565 = vsub.s32 0, %v2426
        %v2566 = vsel %vm2564, %v2565, %v2426
        %v2567 = vmul.u32.u64.compose %v2566, 3817748708
        %v2568 = vextract.low.u32 %v2567
        %v2569 = vextract.high.u32 %v2567
        %v2570 = vshrl.u32 %v2569, 4
        %v2571 = vmul.u32 %v2570, 18
        %v2572 = vsub.s32 %v2566, %v2571
        %v2573 = vsub.s32 0, %v2572
        %v2574 = vsel %vm2564, %v2573, %v2572
        %vm2575 = vcmp.lt.s32.totalorder %v2427, 0
        %v2576 = vsub.s32 0, %v2427
        %v2577 = vsel %vm2575, %v2576, %v2427
        %v2578 = vmul.u32.u64.compose %v2577, 3817748708
        %v2579 = vextract.low.u32 %v2578
        %v2580 = vextract.high.u32 %v2578
        %v2581 = vshrl.u32 %v2580, 4
        %v2582 = vmul.u32 %v2581, 18
        %v2583 = vsub.s32 %v2577, %v2582
        %v2584 = vsub.s32 0, %v2583
        %v2585 = vsel %vm2575, %v2584, %v2583
        %vm2586 = vcmp.lt.s32.totalorder %v2428, 0
        %v2587 = vsub.s32 0, %v2428
        %v2588 = vsel %vm2586, %v2587, %v2428
        %v2589 = vmul.u32.u64.compose %v2588, 3817748708
        %v2590 = vextract.low.u32 %v2589
        %v2591 = vextract.high.u32 %v2589
        %v2592 = vshrl.u32 %v2591, 4
        %v2593 = vmul.u32 %v2592, 18
        %v2594 = vsub.s32 %v2588, %v2593
        %v2595 = vsub.s32 0, %v2594
        %v2596 = vsel %vm2586, %v2595, %v2594
        %vm2597 = vcmp.lt.s32.totalorder %v2429, 0
        %v2598 = vsub.s32 0, %v2429
        %v2599 = vsel %vm2597, %v2598, %v2429
        %v2600 = vmul.u32.u64.compose %v2599, 3817748708
        %v2601 = vextract.low.u32 %v2600
        %v2602 = vextract.high.u32 %v2600
        %v2603 = vshrl.u32 %v2602, 4
        %v2604 = vmul.u32 %v2603, 18
        %v2605 = vsub.s32 %v2599, %v2604
        %v2606 = vsub.s32 0, %v2605
        %v2607 = vsel %vm2597, %v2606, %v2605
        %vm2608 = vcmp.lt.s32.totalorder %v2430, 0
        %v2609 = vsub.s32 0, %v2430
        %v2610 = vsel %vm2608, %v2609, %v2430
        %v2611 = vmul.u32.u64.compose %v2610, 3817748708
        %v2612 = vextract.low.u32 %v2611
        %v2613 = vextract.high.u32 %v2611
        %v2614 = vshrl.u32 %v2613, 4
        %v2615 = vmul.u32 %v2614, 18
        %v2616 = vsub.s32 %v2610, %v2615
        %v2617 = vsub.s32 0, %v2616
        %v2618 = vsel %vm2608, %v2617, %v2616
        %vm2619 = vcmp.lt.s32.totalorder %v2431, 0
        %v2620 = vsub.s32 0, %v2431
        %v2621 = vsel %vm2619, %v2620, %v2431
        %v2622 = vmul.u32.u64.compose %v2621, 3817748708
        %v2623 = vextract.low.u32 %v2622
        %v2624 = vextract.high.u32 %v2622
        %v2625 = vshrl.u32 %v2624, 4
        %v2626 = vmul.u32 %v2625, 18
        %v2627 = vsub.s32 %v2621, %v2626
        %v2628 = vsub.s32 0, %v2627
        %v2629 = vsel %vm2619, %v2628, %v2627
        %vm2630 = vcmp.ne.s32.totalorder %v2442, 0
        %vm2631 = vcmp.ne.s32.totalorder %v2453, 0
        %vm2632 = vcmp.ne.s32.totalorder %v2464, 0
        %vm2633 = vcmp.ne.s32.totalorder %v2475, 0
        %vm2634 = vcmp.ne.s32.totalorder %v2486, 0
        %vm2635 = vcmp.ne.s32.totalorder %v2497, 0
        %vm2636 = vcmp.ne.s32.totalorder %v2508, 0
        %vm2637 = vcmp.ne.s32.totalorder %v2519, 0
        %vm2638 = vcmp.ne.s32.totalorder %v2530, 0
        %vm2639 = vcmp.ne.s32.totalorder %v2541, 0
        %vm2640 = vcmp.ne.s32.totalorder %v2552, 0
        %vm2641 = vcmp.ne.s32.totalorder %v2563, 0
        %vm2642 = vcmp.ne.s32.totalorder %v2574, 0
        %vm2643 = vcmp.ne.s32.totalorder %v2585, 0
        %vm2644 = vcmp.ne.s32.totalorder %v2596, 0
        %vm2645 = vcmp.ne.s32.totalorder %v2607, 0
        %vm2646 = vcmp.ne.s32.totalorder %v2618, 0
        %vm2647 = vcmp.ne.s32.totalorder %v2629, 0
        %vm2648 = vcmp.lt.s32.totalorder %v2442, 0
        %vm2649 = vcmp.lt.s32.totalorder %v2453, 0
        %vm2650 = vcmp.lt.s32.totalorder %v2464, 0
        %vm2651 = vcmp.lt.s32.totalorder %v2475, 0
        %vm2652 = vcmp.lt.s32.totalorder %v2486, 0
        %vm2653 = vcmp.lt.s32.totalorder %v2497, 0
        %vm2654 = vcmp.lt.s32.totalorder %v2508, 0
        %vm2655 = vcmp.lt.s32.totalorder %v2519, 0
        %vm2656 = vcmp.lt.s32.totalorder %v2530, 0
        %vm2657 = vcmp.lt.s32.totalorder %v2541, 0
        %vm2658 = vcmp.lt.s32.totalorder %v2552, 0
        %vm2659 = vcmp.lt.s32.totalorder %v2563, 0
        %vm2660 = vcmp.lt.s32.totalorder %v2574, 0
        %vm2661 = vcmp.lt.s32.totalorder %v2585, 0
        %vm2662 = vcmp.lt.s32.totalorder %v2596, 0
        %vm2663 = vcmp.lt.s32.totalorder %v2607, 0
        %vm2664 = vcmp.lt.s32.totalorder %v2618, 0
        %vm2665 = vcmp.lt.s32.totalorder %v2629, 0
        %vm2666 = vmand %vm2648, %vm2630
        %vm2667 = vmand %vm2649, %vm2631
        %vm2668 = vmand %vm2650, %vm2632
        %vm2669 = vmand %vm2651, %vm2633
        %vm2670 = vmand %vm2652, %vm2634
        %vm2671 = vmand %vm2653, %vm2635
        %vm2672 = vmand %vm2654, %vm2636
        %vm2673 = vmand %vm2655, %vm2637
        %vm2674 = vmand %vm2656, %vm2638
        %vm2675 = vmand %vm2657, %vm2639
        %vm2676 = vmand %vm2658, %vm2640
        %vm2677 = vmand %vm2659, %vm2641
        %vm2678 = vmand %vm2660, %vm2642
        %vm2679 = vmand %vm2661, %vm2643
        %vm2680 = vmand %vm2662, %vm2644
        %vm2681 = vmand %vm2663, %vm2645
        %vm2682 = vmand %vm2664, %vm2646
        %vm2683 = vmand %vm2665, %vm2647
        %v2684 = vadd.s32 %v2442, 18
        %v2685 = vadd.s32 %v2453, 18
        %v2686 = vadd.s32 %v2464, 18
        %v2687 = vadd.s32 %v2475, 18
        %v2688 = vadd.s32 %v2486, 18
        %v2689 = vadd.s32 %v2497, 18
        %v2690 = vadd.s32 %v2508, 18
        %v2691 = vadd.s32 %v2519, 18
        %v2692 = vadd.s32 %v2530, 18
        %v2693 = vadd.s32 %v2541, 18
        %v2694 = vadd.s32 %v2552, 18
        %v2695 = vadd.s32 %v2563, 18
        %v2696 = vadd.s32 %v2574, 18
        %v2697 = vadd.s32 %v2585, 18
        %v2698 = vadd.s32 %v2596, 18
        %v2699 = vadd.s32 %v2607, 18
        %v2700 = vadd.s32 %v2618, 18
        %v2701 = vadd.s32 %v2629, 18
        %v2702 = vsel %vm2666, %v2684, %v2442
        %v2703 = vsel %vm2667, %v2685, %v2453
        %v2704 = vsel %vm2668, %v2686, %v2464
        %v2705 = vsel %vm2669, %v2687, %v2475
        %v2706 = vsel %vm2670, %v2688, %v2486
        %v2707 = vsel %vm2671, %v2689, %v2497
        %v2708 = vsel %vm2672, %v2690, %v2508
        %v2709 = vsel %vm2673, %v2691, %v2519
        %v2710 = vsel %vm2674, %v2692, %v2530
        %v2711 = vsel %vm2675, %v2693, %v2541
        %v2712 = vsel %vm2676, %v2694, %v2552
        %v2713 = vsel %vm2677, %v2695, %v2563
        %v2714 = vsel %vm2678, %v2696, %v2574
        %v2715 = vsel %vm2679, %v2697, %v2585
        %v2716 = vsel %vm2680, %v2698, %v2596
        %v2717 = vsel %vm2681, %v2699, %v2607
        %v2718 = vsel %vm2682, %v2700, %v2618
        %v2719 = vsel %vm2683, %v2701, %v2629
        %vm2720 = vcmp.lt.s32.totalorder %v2702, 16
        %vm2721 = vcmp.lt.s32.totalorder %v2703, 16
        %vm2722 = vcmp.lt.s32.totalorder %v2704, 16
        %vm2723 = vcmp.lt.s32.totalorder %v2705, 16
        %vm2724 = vcmp.lt.s32.totalorder %v2706, 16
        %vm2725 = vcmp.lt.s32.totalorder %v2707, 16
        %vm2726 = vcmp.lt.s32.totalorder %v2708, 16
        %vm2727 = vcmp.lt.s32.totalorder %v2709, 16
        %vm2728 = vcmp.lt.s32.totalorder %v2710, 16
        %vm2729 = vcmp.lt.s32.totalorder %v2711, 16
        %vm2730 = vcmp.lt.s32.totalorder %v2712, 16
        %vm2731 = vcmp.lt.s32.totalorder %v2713, 16
        %vm2732 = vcmp.lt.s32.totalorder %v2714, 16
        %vm2733 = vcmp.lt.s32.totalorder %v2715, 16
        %vm2734 = vcmp.lt.s32.totalorder %v2716, 16
        %vm2735 = vcmp.lt.s32.totalorder %v2717, 16
        %vm2736 = vcmp.lt.s32.totalorder %v2718, 16
        %vm2737 = vcmp.lt.s32.totalorder %v2719, 16
        %v2738 = vsel %vm2720, 1, 0
        %v2739 = vsel %vm2721, 1, 0
        %v2740 = vsel %vm2722, 1, 0
        %v2741 = vsel %vm2723, 1, 0
        %v2742 = vsel %vm2724, 1, 0
        %v2743 = vsel %vm2725, 1, 0
        %v2744 = vsel %vm2726, 1, 0
        %v2745 = vsel %vm2727, 1, 0
        %v2746 = vsel %vm2728, 1, 0
        %v2747 = vsel %vm2729, 1, 0
        %v2748 = vsel %vm2730, 1, 0
        %v2749 = vsel %vm2731, 1, 0
        %v2750 = vsel %vm2732, 1, 0
        %v2751 = vsel %vm2733, 1, 0
        %v2752 = vsel %vm2734, 1, 0
        %v2753 = vsel %vm2735, 1, 0
        %v2754 = vsel %vm2736, 1, 0
        %v2755 = vsel %vm2737, 1, 0
        %v2756 = vcvt.s32.f32 %v2738
        %v2757 = vcvt.s32.f32 %v2739
        %v2758 = vcvt.s32.f32 %v2740
        %v2759 = vcvt.s32.f32 %v2741
        %v2760 = vcvt.s32.f32 %v2742
        %v2761 = vcvt.s32.f32 %v2743
        %v2762 = vcvt.s32.f32 %v2744
        %v2763 = vcvt.s32.f32 %v2745
        %v2764 = vcvt.s32.f32 %v2746
        %v2765 = vcvt.s32.f32 %v2747
        %v2766 = vcvt.s32.f32 %v2748
        %v2767 = vcvt.s32.f32 %v2749
        %v2768 = vcvt.s32.f32 %v2750
        %v2769 = vcvt.s32.f32 %v2751
        %v2770 = vcvt.s32.f32 %v2752
        %v2771 = vcvt.s32.f32 %v2753
        %v2772 = vcvt.s32.f32 %v2754
        %v2773 = vcvt.s32.f32 %v2755
        %v2774 = vmul.f32 %v2377, %v2756
        %v2775 = vmul.f32 %v2378, %v2757
        %v2776 = vmul.f32 %v2379, %v2758
        %v2777 = vmul.f32 %v2380, %v2759
        %v2778 = vmul.f32 %v2381, %v2760
        %v2779 = vmul.f32 %v2382, %v2761
        %v2780 = vmul.f32 %v2383, %v2762
        %v2781 = vmul.f32 %v2384, %v2763
        %v2782 = vmul.f32 %v2385, %v2764
        %v2783 = vmul.f32 %v2386, %v2765
        %v2784 = vmul.f32 %v2387, %v2766
        %v2785 = vmul.f32 %v2388, %v2767
        %v2786 = vmul.f32 %v2389, %v2768
        %v2787 = vmul.f32 %v2390, %v2769
        %v2788 = vmul.f32 %v2391, %v2770
        %v2789 = vmul.f32 %v2392, %v2771
        %v2790 = vmul.f32 %v2393, %v2772
        %v2791 = vmul.f32 %v2394, %v2773
        %v2792 = vadd.f32 %v2774, %v2775
        %v2793 = vadd.f32 %v2792, %v2776
        %v2794 = vadd.f32 %v2793, %v2777
        %v2795 = vadd.f32 %v2794, %v2778
        %v2796 = vadd.f32 %v2795, %v2779
        %v2797 = vadd.f32 %v2796, %v2780
        %v2798 = vadd.f32 %v2797, %v2781
        %v2799 = vadd.f32 %v2798, %v2782
        %v2800 = vadd.f32 %v2799, %v2783
        %v2801 = vadd.f32 %v2800, %v2784
        %v2802 = vadd.f32 %v2801, %v2785
        %v2803 = vadd.f32 %v2802, %v2786
        %v2804 = vadd.f32 %v2803, %v2787
        %v2805 = vadd.f32 %v2804, %v2788
        %v2806 = vadd.f32 %v2805, %v2789
        %v2807 = vadd.f32 %v2806, %v2790
        %v2808 = vadd.f32 %v2807, %v2791
        %v2809 = vrot.slane %v2808, 4
        %v2810 = vadd.f32 %v2808, %v2809
        %v2811 = vrot.slane %v2810, 2
        %v2812 = vadd.f32 %v2810, %v2811
        %v2813 = vrot.slane %v2812, 1
        %v2814 = vadd.f32 %v2812, %v2813
        %2815 = vst [vmem:[%s174] sm:$0x1] %v2814
        %v2816 = vmul.f32 %v2377, %v2377
        %v2817 = vmul.f32 %v2378, %v2378
        %v2818 = vmul.f32 %v2379, %v2379
        %v2819 = vmul.f32 %v2380, %v2380
        %v2820 = vmul.f32 %v2381, %v2381
        %v2821 = vmul.f32 %v2382, %v2382
        %v2822 = vmul.f32 %v2383, %v2383
        %v2823 = vmul.f32 %v2384, %v2384
        %v2824 = vmul.f32 %v2385, %v2385
        %v2825 = vmul.f32 %v2386, %v2386
        %v2826 = vmul.f32 %v2387, %v2387
        %v2827 = vmul.f32 %v2388, %v2388
        %v2828 = vmul.f32 %v2389, %v2389
        %v2829 = vmul.f32 %v2390, %v2390
        %v2830 = vmul.f32 %v2391, %v2391
        %v2831 = vmul.f32 %v2392, %v2392
        %v2832 = vmul.f32 %v2393, %v2393
        %v2833 = vmul.f32 %v2394, %v2394
        %v2834 = vmul.f32 %v2816, %v2756
        %v2835 = vmul.f32 %v2817, %v2757
        %v2836 = vmul.f32 %v2818, %v2758
        %v2837 = vmul.f32 %v2819, %v2759
        %v2838 = vmul.f32 %v2820, %v2760
        %v2839 = vmul.f32 %v2821, %v2761
        %v2840 = vmul.f32 %v2822, %v2762
        %v2841 = vmul.f32 %v2823, %v2763
        %v2842 = vmul.f32 %v2824, %v2764
        %v2843 = vmul.f32 %v2825, %v2765
        %v2844 = vmul.f32 %v2826, %v2766
        %v2845 = vmul.f32 %v2827, %v2767
        %v2846 = vmul.f32 %v2828, %v2768
        %v2847 = vmul.f32 %v2829, %v2769
        %v2848 = vmul.f32 %v2830, %v2770
        %v2849 = vmul.f32 %v2831, %v2771
        %v2850 = vmul.f32 %v2832, %v2772
        %v2851 = vmul.f32 %v2833, %v2773
        %v2852 = vadd.f32 %v2834, %v2835
        %v2853 = vadd.f32 %v2852, %v2836
        %v2854 = vadd.f32 %v2853, %v2837
        %v2855 = vadd.f32 %v2854, %v2838
        %v2856 = vadd.f32 %v2855, %v2839
        %v2857 = vadd.f32 %v2856, %v2840
        %v2858 = vadd.f32 %v2857, %v2841
        %v2859 = vadd.f32 %v2858, %v2842
        %v2860 = vadd.f32 %v2859, %v2843
        %v2861 = vadd.f32 %v2860, %v2844
        %v2862 = vadd.f32 %v2861, %v2845
        %v2863 = vadd.f32 %v2862, %v2846
        %v2864 = vadd.f32 %v2863, %v2847
        %v2865 = vadd.f32 %v2864, %v2848
        %v2866 = vadd.f32 %v2865, %v2849
        %v2867 = vadd.f32 %v2866, %v2850
        %v2868 = vadd.f32 %v2867, %v2851
        %v2869 = vrot.slane %v2868, 4
        %v2870 = vadd.f32 %v2868, %v2869
        %v2871 = vrot.slane %v2870, 2
        %v2872 = vadd.f32 %v2870, %v2871
        %v2873 = vrot.slane %v2872, 1
        %v2874 = vadd.f32 %v2872, %v2873
        %2875 = vst [vmem:[%s174 + $0x1] sm:$0x1] %v2874
        %s2876 = sand.u32 %s76, 1
        %s2877 = scalar_lea.sflag [#allocation3], %s2876
        %s2878 = sand.u32 %s76, 1
        %s2879 = smul.addr %s2878, 144
        %s2880 = scalar_lea.vmem [#allocation2], %s2879
        %s2881 = sand.u32 %s102, 1
        %s2882 = scalar_lea.sflag [#allocation5], %s2881
        %s2883 = sand.u32 %s102, 1
        %s2884 = smul.addr %s2883, 2
        %s2885 = scalar_lea.vmem [#allocation4], %s2884
        // Predicated region
        $region29: #{tpu_custom_call.1} parent=27 // pred_check
          %p2886 = pneg %p86
        $region30: #{tpu_custom_call.1} parent=27 // pred_check_branch
          %2888 = sbr.rel (%p2886) target = $region32
        $region31: #{tpu_custom_call.1} parent=27 // pred_region
          %s2890 = ssub.s32 2304, 2304
          %2891 = vsyncadd %s2877, %s2890
          %s2892 = smul.addr %s21, 18
          %s2893 = smul.addr %s2892, 128
          %s2894 = scalar_lea.hbm %s2, %s2893
          %s2895 = sshll.u32 %s2880, 4
          %s2896 = int_to_ptr.vmem [resolvable:$true] %s2895
          %2901 = dma.vmem_to_hbm [thread:$0]  %s2896, 2304, %s2894, %s2877, 128, 128, 8
        $region32: #{tpu_custom_call.1} parent=27 // pred_fallthru
          _
        // Predicated region
        $region33: #{tpu_custom_call.1} parent=27 // pred_check
          %p2902 = pneg %p112
        $region34: #{tpu_custom_call.1} parent=27 // pred_check_branch
          %2904 = sbr.rel (%p2902) target = $region36
        $region35: #{tpu_custom_call.1} parent=27 // pred_region
          %s2906 = ssub.s32 32, 32
          %2907 = vsyncadd %s2882, %s2906
          %s2908 = smul.addr %s21, 32
          %s2909 = scalar_lea.hbm %s3, %s2908
          %s2911 = sshll.u32 %s2885, 4
          %s2912 = int_to_ptr.vmem [resolvable:$true] %s2911
          %2914 = dma.vmem_to_hbm [thread:$0]  %s2912, 32, %s2909, %s2882
        $region36: #{tpu_custom_call.1} parent=27 // pred_fallthru
          _
      $region28: #{tpu_custom_call.1} parent=5 // pred_fallthru
        _
      %p2915 = scmp.le.s32.totalorder 2, %s16
      // Predicated region
      $region37: #{tpu_custom_call.1} parent=5 // pred_check
        %p2916 = pneg %p2915
      $region38: #{tpu_custom_call.1} parent=5 // pred_check_branch
        %2918 = sbr.rel (%p2916) target = $region40
      $region39: #{tpu_custom_call.1} parent=5 // pred_region
        %s2919 = ssub.s32 %s16, 2
        // Predicated region
        $region41: #{tpu_custom_call.1} parent=39 // pred_check
          %p2920 = pneg %p92
        $region42: #{tpu_custom_call.1} parent=39 // pred_check_branch
          %2922 = sbr.rel (%p2920) target = $region44
        $region43: #{tpu_custom_call.1} parent=39 // pred_region
          %s2923 = sand.u32 %s77, 1
          %s2924 = scalar_lea.sflag [#allocation3], %s2923
          %s2925 = sand.u32 %s77, 1
          %s2926 = smul.addr %s2925, 144
          %s2927 = scalar_lea.vmem [#allocation2], %s2926
          %2928 = dma.done %s2924, 2304
        $region44: #{tpu_custom_call.1} parent=39 // pred_fallthru
          _
        // Predicated region
        $region45: #{tpu_custom_call.1} parent=39 // pred_check
          %p2929 = pneg %p118
        $region46: #{tpu_custom_call.1} parent=39 // pred_check_branch
          %2931 = sbr.rel (%p2929) target = $region48
        $region47: #{tpu_custom_call.1} parent=39 // pred_region
          %s2932 = sand.u32 %s103, 1
          %s2933 = scalar_lea.sflag [#allocation5], %s2932
          %s2934 = sand.u32 %s103, 1
          %s2935 = smul.addr %s2934, 2
          %s2936 = scalar_lea.vmem [#allocation4], %s2935
          %2937 = dma.done %s2933, 32
        $region48: #{tpu_custom_call.1} parent=39 // pred_fallthru
          _
      $region40: #{tpu_custom_call.1} parent=5 // pred_fallthru
        _
    $region6: #{tpu_custom_call.1} parent=1 // loop_footer
      %s20 = sadd.s32 1, %s16
    $region7: #{tpu_custom_call.1} parent=1 // loop_footer_branch
      %15 = sbr.rel target = $region3
    $region8: #{tpu_custom_call.1} parent=1 // loop_exit
      _
    %2938 = vsyncpa [#allocation3], 1
    %s2939 = scalar_lea.sflag [#allocation3], 1
    %2940 = vsyncpa %s2939, 1
    %2941 = vsyncpa [#allocation5], 1
    %s2942 = scalar_lea.sflag [#allocation5], 1
    %2943 = vsyncpa %s2942, 1

</llo_original>
